<compile_context>
chip_gen: v6e
topology: v6e:2x2x1
jax: 0.10.0
libtpu: 0.0.40
codegen_flags: <defaults>
</compile_context>

<pallas_src>
import jax
import jax.numpy as jnp
from jax.experimental import pallas as pl
from jax.experimental.pallas import tpu as pltpu

L = 512   # self.L
D = 128   # self.D
K = 1     # self.K

_NEG_INF = -1e30  # finite "minus infinity" for masked attention logits


def _round_up(x, m):
    return (x + m - 1) // m * m


def _vmem_budget_bytes():
    """Generation-aware VMEM cap: ~75% of physical capacity (leave headroom
    for Mosaic internal scratch). v7x: ~48 MiB; v5e/v6e: ~96 MiB."""
    cap = 128 << 20
    try:
        cap = int(getattr(pltpu.get_tpu_info(), "vmem_capacity_bytes", cap))
    except Exception:
        pass
    return int(cap * 3 // 4)


def _vmem_need_bytes(tn, input_dim):
    x_tile = 2 * tn * input_dim * 4                        # f32 x, double-buffered
    w1 = 2 * input_dim * L * 2                             # bf16 W1 (2 pipeline buffers)
    attn = 2 * ((L * D + D * K) * 2 + (L + D + K) * 4)     # bf16 Wa1/Wa2, f32 biases
    acts = tn * (2 * input_dim + 6 * L + 6 * D + 8)        # in-flight activations
    scratch_outs = (L + 1) * 4 + 2 * (L + 1) * 4
    return x_tile + w1 + attn + acts + scratch_outs


def _choose_tn(input_dim, budget):
    tn = 2048
    while tn > 256 and _vmem_need_bytes(tn, input_dim) > budget // 2:
        tn //= 2
    return tn


def _make_kernel(n_total, tn, j_tiles):
    """Kernel factory: bakes in the true instance count (tail masking) and the
    number of tiles per split (row-offset computation)."""

    def kernel(x_ref, w1_ref, b1_ref, wa1_ref, ba1_ref, wa2_ref, ba2_ref,
               acc_out_ref, m_out_ref, m_ref, acc_ref):
        c = pl.program_id(0)   # instance-axis split ("parallel": one per TC on v7x)
        j = pl.program_id(1)   # tile within the split (carried reduction)

        # ---- init running softmax state at this split's first tile ----------
        @pl.when(j == 0)
        def _():
            m_ref[...] = jnp.full_like(m_ref, _NEG_INF)
            acc_ref[...] = jnp.zeros_like(acc_ref)

        # validity mask for padded / out-of-range rows
        row = jax.lax.broadcasted_iota(jnp.int32, (tn, 1), 0) + (c * j_tiles + j) * tn
        valid = row < n_total                                        # (tn, 1)

        # ---- feature head: Linear(input_dim, 512) + ReLU (+Dropout=identity)
        # x streamed as f32 (single HBM pass); cast the tile to bf16 for the
        # MXU here (cheap vpack, hidden under the matmul), f32 accumulation.
        x_lo = x_ref[...].astype(jnp.bfloat16)
        feat = jnp.dot(x_lo, w1_ref[...],
                       preferred_element_type=jnp.float32)          # (tn, L) f32
        feat = jnp.maximum(feat + b1_ref[...], 0.0)
        feat = jnp.where(valid, feat, 0.0)                           # zero padded rows

        # TODO(synk): RRTEncoder(mlp_dim=512, epeg_k=15, crmsa_k=3) definition
        # was not provided with the module; it is treated as identity here.

        # ---- gated attention: Linear(512,128) -> Tanh -> Linear(128,1) ------
        # bf16 MXU path (Wa1/Wa2 pre-cast in the wrapper), f32 accumulation.
        feat_lo = feat.astype(jnp.bfloat16)
        h = jnp.tanh(jnp.dot(feat_lo, wa1_ref[...],
                             preferred_element_type=jnp.float32) + ba1_ref[...])
        a = jnp.dot(h.astype(jnp.bfloat16), wa2_ref[...],
                    preferred_element_type=jnp.float32) + ba2_ref[...]   # (tn, 1)
        a = jnp.where(valid, a, _NEG_INF)                            # mask padding

        # ---- online softmax over the instance axis (flash style) ------------
        # The denominator is dropped: the 1/l scale cancels exactly under the
        # final L2 normalization, so only the running max m (stability) and the
        # weighted feature sum acc are carried.
        m_prev = m_ref[...]                                          # (1, 1)
        m_new = jnp.maximum(m_prev, jnp.max(a, axis=0, keepdims=True))
        alpha = jnp.exp(m_prev - m_new)                              # (1, 1)
        e = jnp.exp(a - m_new)                                       # (tn, 1); 0 on padding
        # VPU/XLU lane-broadcast + sublane reduce; free filler on MXU-bound
        # chips.  TODO(synk): if a bundle dump shows VALU/XLU binding on
        # v6e/v7x, move this to a lax.dot_general contraction over rows (MXU).
        acc_ref[...] = alpha * acc_ref[...] + jnp.sum(e * feat, axis=0,
                                                      keepdims=True)
        m_ref[...] = m_new

        # ---- finalize this split: emit partial (acc, m) ---------------------
        @pl.when(j == pl.num_programs(1) - 1)
        def _():
            acc_out_ref[...] = acc_ref[...].reshape(1, 1, L)
            m_out_ref[...] = m_ref[...].reshape(1, 1, 1)

    return kernel


def plip_adapter(x, params, *, tn=None, num_splits=None):
    """PlipAdapter forward. x: (N, input_dim) float32 -> (1, 512) float32."""
    n, input_dim = x.shape
    budget = _vmem_budget_bytes()
    if tn is None:
        tn = _choose_tn(input_dim, budget)
    tn = _round_up(max(8, min(tn, _round_up(n, 8))), 8)
    n_tiles = pl.cdiv(n, tn)

    # 2-way split of the instance axis: independent partial reductions
    # ("parallel" axis) so v7x can use both TensorCores; on 1-TC chips the
    # extra split costs one extra init/finalize and a tiny merge epilogue.
    if num_splits is None:
        num_splits = 2 if n_tiles >= 2 else 1
    num_splits = int(max(1, min(num_splits, n_tiles)))
    j_tiles = pl.cdiv(pl.cdiv(n, num_splits), tn)

    # bf16 weights for all MXU matmuls (f32 accumulation); biases stay f32.
    w1 = params["w1"].astype(jnp.bfloat16)
    wa1 = params["wa1"].astype(jnp.bfloat16)
    wa2 = params["wa2"].astype(jnp.bfloat16)
    b1, ba1, ba2 = params["b1"], params["ba1"], params["ba2"]

    flops = 2 * n * (input_dim * L + L * D + D * K) + 8 * n * L
    transcendentals = n * (D + 1)
    bytes_accessed = (x.size * 4
                      + (w1.size + wa1.size + wa2.size) * 2
                      + (b1.size + ba1.size + ba2.size) * 4
                      + num_splits * (L + 1) * 4)

    need = _vmem_need_bytes(tn, input_dim)
    vmem_limit = int(min(budget, max(32 << 20, int(1.5 * need) + (8 << 20))))

    grid_spec = pltpu.PrefetchScalarGridSpec(
        num_scalar_prefetch=0,
        grid=(num_splits, j_tiles),
        in_specs=[
            pl.BlockSpec((tn, input_dim), lambda c, j: (c * j_tiles + j, 0)),  # x (streamed f32)
            pl.BlockSpec((input_dim, L), lambda c, j: (0, 0)),                 # W1 (resident bf16)
            pl.BlockSpec((1, L), lambda c, j: (0, 0)),                         # b1
            pl.BlockSpec((L, D), lambda c, j: (0, 0)),                         # Wa1 (bf16)
            pl.BlockSpec((1, D), lambda c, j: (0, 0)),                         # ba1
            pl.BlockSpec((D, K), lambda c, j: (0, 0)),                         # Wa2 (bf16)
            pl.BlockSpec((1, K), lambda c, j: (0, 0)),                         # ba2
        ],
        out_specs=[
            pl.BlockSpec((1, 1, L), lambda c, j: (c, 0, 0)),   # partial weighted feature sum
            pl.BlockSpec((1, 1, 1), lambda c, j: (c, 0, 0)),   # partial running max
        ],
        scratch_shapes=[
            pltpu.VMEM((1, 1), jnp.float32),                   # running max m
            pltpu.VMEM((1, L), jnp.float32),                   # running weighted sum
        ],
    )

    acc_p, m_p = pl.pallas_call(
        _make_kernel(n, tn, j_tiles),
        out_shape=(jax.ShapeDtypeStruct((num_splits, 1, L), jnp.float32),
                   jax.ShapeDtypeStruct((num_splits, 1, 1), jnp.float32)),
        grid_spec=grid_spec,
        compiler_params=pltpu.CompilerParams(
            dimension_semantics=("parallel", "arbitrary"),
            vmem_limit_bytes=vmem_limit),
        cost_estimate=pl.CostEstimate(flops=flops,
                                      transcendentals=transcendentals,
                                      bytes_accessed=bytes_accessed),
    )(x, w1, b1, wa1, ba1, wa2, ba2)

    # ---- tiny merge epilogue: combine per-split partials, L2-normalize ------
    m = m_p[:, 0, 0]                                     # (num_splits,)
    w = jnp.exp(m - jnp.max(m))                          # cross-split softmax weights
    bag = jnp.sum(w[:, None] * acc_p[:, 0, :], axis=0, keepdims=True)   # (1, L)
    return bag * jax.lax.rsqrt(jnp.sum(bag * bag, axis=-1, keepdims=True) + 1e-12)


def plip_adapter_ref(x, params):
    """Pure-JAX reference mirroring the kernel's bf16 matmul numerics."""
    w1 = params["w1"].astype(jnp.bfloat16)
    wa1 = params["wa1"].astype(jnp.bfloat16)
    wa2 = params["wa2"].astype(jnp.bfloat16)
    feat = jnp.dot(x.astype(jnp.bfloat16), w1,
                   preferred_element_type=jnp.float32) + params["b1"]
    feat = jnp.maximum(feat, 0.0)
    h = jnp.tanh(jnp.dot(feat.astype(jnp.bfloat16), wa1,
                         preferred_element_type=jnp.float32) + params["ba1"])
    a = jnp.dot(h.astype(jnp.bfloat16), wa2,
                preferred_element_type=jnp.float32) + params["ba2"]   # (N, 1)
    a = jax.nn.softmax(a.T, axis=-1)                                  # (1, N)
    bag = a @ feat                                                    # (1, 512)
    return bag * jax.lax.rsqrt(jnp.sum(bag * bag, axis=-1, keepdims=True) + 1e-12)


def _xavier_normal(key, fan_in, fan_out):
    std = (2.0 / (fan_in + fan_out)) ** 0.5
    return std * jax.random.normal(key, (fan_in, fan_out), dtype=jnp.float32)


def init_params(key, input_dim):
    """Deterministic xavier-normal weights, zero biases (matches initialize_weights)."""
    k1, k2, k3 = jax.random.split(key, 3)
    return {
        "w1":  _xavier_normal(k1, input_dim, L),       # feature Linear
        "b1":  jnp.zeros((1, L), jnp.float32),
        "wa1": _xavier_normal(k2, L, D),               # attention Linear 1
        "ba1": jnp.zeros((1, D), jnp.float32),
        "wa2": _xavier_normal(k3, D, K),               # attention Linear 2
        "ba2": jnp.zeros((1, K), jnp.float32),
    }


if __name__ == "__main__":
    N, input_dim = 200, 256                 # small bag; N not a multiple of TN
    key = jax.random.PRNGKey(0)
    kx, kp = jax.random.split(key)
    x = jax.random.normal(kx, (N, input_dim), dtype=jnp.float32)
    params = init_params(kp, input_dim)

    # tn=128 forces a 2-way split with a padded tail tile (exercises masking
    # and the cross-split merge path).
    out = jax.block_until_ready(plip_adapter(x, params, tn=128))
    ref = jax.block_until_ready(plip_adapter_ref(x, params))

    assert out.shape == (1, L)
    assert bool(jnp.all(jnp.isfinite(out)))
    assert bool(jnp.allclose(out, ref, atol=2e-3, rtol=2e-3)), \
        float(jnp.max(jnp.abs(out - ref)))
    print("KERNEL_OK")
</pallas_src>

<mosaic_0001>
module attributes {stable_mosaic.version = 11 : i64} {
  func.func @kernel(%arg0: i32, %arg1: i32, %arg2: memref<128x256xf32, #tpu.memory_space<vmem>>, %arg3: memref<256x512xbf16, #tpu.memory_space<vmem>>, %arg4: memref<1x512xf32, #tpu.memory_space<vmem>>, %arg5: memref<512x128xbf16, #tpu.memory_space<vmem>>, %arg6: memref<1x128xf32, #tpu.memory_space<vmem>>, %arg7: memref<128x1xbf16, #tpu.memory_space<vmem>>, %arg8: memref<1x1xf32, #tpu.memory_space<vmem>>, %arg9: memref<1x1x512xf32, #tpu.memory_space<vmem>>, %arg10: memref<1x1x1xf32, #tpu.memory_space<vmem>>, %arg11: memref<1x1xf32, #tpu.memory_space<vmem>>, %arg12: memref<1x512xf32, #tpu.memory_space<vmem>>) attributes {dimension_semantics = [#tpu.dimension_semantics<parallel>, #tpu.dimension_semantics<arbitrary>], iteration_bounds = array<i64: 2, 1>, scalar_prefetch = 0 : i64, scratch_operands = 2 : i64, tpu.core_type = #tpu.core_type<tc>, window_params = [{transform_indices = @transform_0, window_bounds = array<i64: 128, 256>}, {pipeline_mode = #tpu.pipeline_mode<synchronous>, transform_indices = @transform_1, window_bounds = array<i64: 256, 512>}, {pipeline_mode = #tpu.pipeline_mode<synchronous>, transform_indices = @transform_2, window_bounds = array<i64: 1, 512>}, {pipeline_mode = #tpu.pipeline_mode<synchronous>, transform_indices = @transform_3, window_bounds = array<i64: 512, 128>}, {pipeline_mode = #tpu.pipeline_mode<synchronous>, transform_indices = @transform_4, window_bounds = array<i64: 1, 128>}, {pipeline_mode = #tpu.pipeline_mode<synchronous>, transform_indices = @transform_5, window_bounds = array<i64: 128, 1>}, {pipeline_mode = #tpu.pipeline_mode<synchronous>, transform_indices = @transform_6, window_bounds = array<i64: 1, 1>}, {transform_indices = @transform_7, window_bounds = array<i64: 1, 1, 512>}, {transform_indices = @transform_8, window_bounds = array<i64: 1, 1, 1>}]} {
    %c0_i32 = arith.constant 0 : i32
    %0 = arith.cmpi eq, %arg1, %c0_i32 : i32
    %1 = arith.extui %0 : i1 to i32
    %c0_i32_0 = arith.constant 0 : i32
    %2 = arith.cmpi ne, %1, %c0_i32_0 : i32
    scf.if %2 {
      %cst_31 = arith.constant -1.000000e+30 : f32
      %61 = vector.broadcast %cst_31 : f32 to vector<1x1xf32>
      %c0_32 = arith.constant 0 : index
      %c0_33 = arith.constant 0 : index
      %62 = vector.load %arg11[%c0_32, %c0_33] : memref<1x1xf32, #tpu.memory_space<vmem>>, vector<1x1xf32>
      tpu.vector_store %arg11[%c0_32, %c0_33], %61 {strides = array<i32>} : memref<1x1xf32, #tpu.memory_space<vmem>>, vector<1x1xf32>,
      %cst_34 = arith.constant 0.000000e+00 : f32
      %63 = vector.broadcast %cst_34 : f32 to vector<1x512xf32>
      %c0_35 = arith.constant 0 : index
      %c0_36 = arith.constant 0 : index
      %64 = vector.load %arg12[%c0_35, %c0_36] : memref<1x512xf32, #tpu.memory_space<vmem>>, vector<1x512xf32>
      tpu.vector_store %arg12[%c0_35, %c0_36], %63 {strides = array<i32>} : memref<1x512xf32, #tpu.memory_space<vmem>>, vector<1x512xf32>,
    } else {
    }
    %3 = tpu.iota {dimensions = array<i32: 0>} : vector<128x1xi32>
    %c1_i32 = arith.constant 1 : i32
    %4 = arith.muli %arg0, %c1_i32 : i32
    %5 = arith.addi %4, %arg1 : i32
    %c128_i32 = arith.constant 128 : i32
    %6 = arith.muli %5, %c128_i32 : i32
    %7 = vector.broadcast %6 : i32 to vector<128x1xi32>
    %8 = arith.addi %3, %7 : vector<128x1xi32>
    %c200_i32 = arith.constant 200 : i32
    %9 = vector.broadcast %c200_i32 : i32 to vector<128x1xi32>
    %10 = arith.cmpi slt, %8, %9 : vector<128x1xi32>
    %c0 = arith.constant 0 : index
    %c0_1 = arith.constant 0 : index
    %11 = vector.load %arg2[%c0, %c0_1] : memref<128x256xf32, #tpu.memory_space<vmem>>, vector<128x256xf32>
    %12 = arith.truncf %11 : vector<128x256xf32> to vector<128x256xbf16>
    %c0_2 = arith.constant 0 : index
    %c0_3 = arith.constant 0 : index
    %13 = vector.load %arg3[%c0_2, %c0_3] : memref<256x512xbf16, #tpu.memory_space<vmem>>, vector<256x512xbf16>
    %cst = arith.constant dense<0.000000e+00> : vector<128x512xf32>
    %14 = tpu.matmul %12, %13, %cst {dimension_numbers = #tpu.dot_dimension_numbers<[1], [0], [0], [1], [0, 0, 1, 1], [], []>} : vector<128x256xbf16>, vector<256x512xbf16>, vector<128x512xf32> -> vector<128x512xf32>
    %c0_4 = arith.constant 0 : index
    %c0_5 = arith.constant 0 : index
    %15 = vector.load %arg4[%c0_4, %c0_5] : memref<1x512xf32, #tpu.memory_space<vmem>>, vector<1x512xf32>
    %16 = vector.broadcast %15 : vector<1x512xf32> to vector<128x512xf32>
    %17 = arith.addf %14, %16 : vector<128x512xf32>
    %cst_6 = arith.constant 0.000000e+00 : f32
    %18 = vector.broadcast %cst_6 : f32 to vector<128x512xf32>
    %19 = arith.maximumf %17, %18 : vector<128x512xf32>
    %cst_7 = arith.constant 0.000000e+00 : f32
    %20 = vector.shape_cast %10 : vector<128x1xi1> to vector<128x1xi1>
    %21 = vector.broadcast %20 : vector<128x1xi1> to vector<128x512xi1>
    %22 = vector.broadcast %cst_7 : f32 to vector<128x512xf32>
    %23 = arith.select %21, %19, %22 : vector<128x512xi1>, vector<128x512xf32>
    %24 = arith.truncf %23 : vector<128x512xf32> to vector<128x512xbf16>
    %c0_8 = arith.constant 0 : index
    %c0_9 = arith.constant 0 : index
    %25 = vector.load %arg5[%c0_8, %c0_9] : memref<512x128xbf16, #tpu.memory_space<vmem>>, vector<512x128xbf16>
    %cst_10 = arith.constant dense<0.000000e+00> : vector<128x128xf32>
    %26 = tpu.matmul %24, %25, %cst_10 {dimension_numbers = #tpu.dot_dimension_numbers<[1], [0], [0], [1], [0, 0, 1, 1], [], []>} : vector<128x512xbf16>, vector<512x128xbf16>, vector<128x128xf32> -> vector<128x128xf32>
    %c0_11 = arith.constant 0 : index
    %c0_12 = arith.constant 0 : index
    %27 = vector.load %arg6[%c0_11, %c0_12] : memref<1x128xf32, #tpu.memory_space<vmem>>, vector<1x128xf32>
    %28 = vector.broadcast %27 : vector<1x128xf32> to vector<128x128xf32>
    %29 = arith.addf %26, %28 : vector<128x128xf32>
    %30 = math.tanh %29 : vector<128x128xf32>
    %31 = arith.truncf %30 : vector<128x128xf32> to vector<128x128xbf16>
    %c0_13 = arith.constant 0 : index
    %c0_14 = arith.constant 0 : index
    %32 = vector.load %arg7[%c0_13, %c0_14] : memref<128x1xbf16, #tpu.memory_space<vmem>>, vector<128x1xbf16>
    %cst_15 = arith.constant dense<0.000000e+00> : vector<128x1xf32>
    %33 = tpu.matmul %31, %32, %cst_15 {dimension_numbers = #tpu.dot_dimension_numbers<[1], [0], [0], [1], [0, 0, 1, 1], [], []>} : vector<128x128xbf16>, vector<128x1xbf16>, vector<128x1xf32> -> vector<128x1xf32>
    %c0_16 = arith.constant 0 : index
    %c0_17 = arith.constant 0 : index
    %34 = vector.load %arg8[%c0_16, %c0_17] : memref<1x1xf32, #tpu.memory_space<vmem>>, vector<1x1xf32>
    %35 = vector.broadcast %34 : vector<1x1xf32> to vector<128x1xf32>
    %36 = arith.addf %33, %35 : vector<128x1xf32>
    %cst_18 = arith.constant -1.000000e+30 : f32
    %37 = vector.broadcast %cst_18 : f32 to vector<128x1xf32>
    %38 = arith.select %10, %36, %37 : vector<128x1xi1>, vector<128x1xf32>
    %c0_19 = arith.constant 0 : index
    %c0_20 = arith.constant 0 : index
    %39 = vector.load %arg11[%c0_19, %c0_20] : memref<1x1xf32, #tpu.memory_space<vmem>>, vector<1x1xf32>
    %cst_21 = arith.constant dense<0xFF800000> : vector<1xf32>
    %40 = vector.multi_reduction <maximumf>, %38, %cst_21 [0] : vector<128x1xf32> to vector<1xf32>
    %41 = vector.shape_cast %40 : vector<1xf32> to vector<1x1xf32>
    %42 = arith.maximumf %39, %41 : vector<1x1xf32>
    %43 = arith.subf %39, %42 : vector<1x1xf32>
    %44 = math.exp %43 : vector<1x1xf32>
    %45 = vector.broadcast %42 : vector<1x1xf32> to vector<128x1xf32>
    %46 = arith.subf %38, %45 : vector<128x1xf32>
    %47 = math.exp %46 : vector<128x1xf32>
    %c0_22 = arith.constant 0 : index
    %c0_23 = arith.constant 0 : index
    %48 = vector.load %arg12[%c0_22, %c0_23] : memref<1x512xf32, #tpu.memory_space<vmem>>, vector<1x512xf32>
    %49 = vector.broadcast %44 : vector<1x1xf32> to vector<1x512xf32>
    %50 = arith.mulf %49, %48 : vector<1x512xf32>
    %51 = vector.broadcast %47 : vector<128x1xf32> to vector<128x512xf32>
    %52 = arith.mulf %51, %23 : vector<128x512xf32>
    %cst_24 = arith.constant dense<0.000000e+00> : vector<512xf32>
    %53 = vector.multi_reduction <add>, %52, %cst_24 [0] : vector<128x512xf32> to vector<512xf32>
    %54 = vector.shape_cast %53 : vector<512xf32> to vector<1x512xf32>
    %55 = arith.addf %50, %54 : vector<1x512xf32>
    %c0_25 = arith.constant 0 : index
    %c0_26 = arith.constant 0 : index
    %56 = vector.load %arg12[%c0_25, %c0_26] : memref<1x512xf32, #tpu.memory_space<vmem>>, vector<1x512xf32>
    tpu.vector_store %arg12[%c0_25, %c0_26], %55 {strides = array<i32>} : memref<1x512xf32, #tpu.memory_space<vmem>>, vector<1x512xf32>,
    %c0_27 = arith.constant 0 : index
    %c0_28 = arith.constant 0 : index
    %57 = vector.load %arg11[%c0_27, %c0_28] : memref<1x1xf32, #tpu.memory_space<vmem>>, vector<1x1xf32>
    tpu.vector_store %arg11[%c0_27, %c0_28], %42 {strides = array<i32>} : memref<1x1xf32, #tpu.memory_space<vmem>>, vector<1x1xf32>,
    %c0_i32_29 = arith.constant 0 : i32
    %58 = arith.cmpi eq, %arg1, %c0_i32_29 : i32
    %59 = arith.extui %58 : i1 to i32
    %c0_i32_30 = arith.constant 0 : i32
    %60 = arith.cmpi ne, %59, %c0_i32_30 : i32
    scf.if %60 {
      %c0_31 = arith.constant 0 : index
      %c0_32 = arith.constant 0 : index
      %61 = vector.load %arg12[%c0_31, %c0_32] : memref<1x512xf32, #tpu.memory_space<vmem>>, vector<1x512xf32>
      %62 = vector.shape_cast %61 : vector<1x512xf32> to vector<1x1x512xf32>
      %c0_33 = arith.constant 0 : index
      %c0_34 = arith.constant 0 : index
      %c0_35 = arith.constant 0 : index
      %63 = vector.load %arg9[%c0_33, %c0_34, %c0_35] : memref<1x1x512xf32, #tpu.memory_space<vmem>>, vector<1x1x512xf32>
      tpu.vector_store %arg9[%c0_33, %c0_34, %c0_35], %62 {strides = array<i32>} : memref<1x1x512xf32, #tpu.memory_space<vmem>>, vector<1x1x512xf32>,
      %c0_36 = arith.constant 0 : index
      %c0_37 = arith.constant 0 : index
      %64 = vector.load %arg11[%c0_36, %c0_37] : memref<1x1xf32, #tpu.memory_space<vmem>>, vector<1x1xf32>
      %65 = vector.shape_cast %64 : vector<1x1xf32> to vector<1x1x1xf32>
      %c0_38 = arith.constant 0 : index
      %c0_39 = arith.constant 0 : index
      %c0_40 = arith.constant 0 : index
      %66 = vector.load %arg10[%c0_38, %c0_39, %c0_40] : memref<1x1x1xf32, #tpu.memory_space<vmem>>, vector<1x1x1xf32>
      tpu.vector_store %arg10[%c0_38, %c0_39, %c0_40], %65 {strides = array<i32>} : memref<1x1x1xf32, #tpu.memory_space<vmem>>, vector<1x1x1xf32>,
    } else {
    }
    return
  }
  func.func @transform_0(%arg0: i32, %arg1: i32) -> (i32, i32) {
    %c1_i32 = arith.constant 1 : i32
    %0 = arith.muli %arg0, %c1_i32 : i32
    %1 = arith.addi %0, %arg1 : i32
    %c0_i32 = arith.constant 0 : i32
    %c0_i32_0 = arith.constant 0 : i32
    return %1, %c0_i32 : i32, i32
  }
  func.func @transform_1(%arg0: i32, %arg1: i32) -> (i32, i32) {
    %c0_i32 = arith.constant 0 : i32
    %c0_i32_0 = arith.constant 0 : i32
    %c0_i32_1 = arith.constant 0 : i32
    return %c0_i32, %c0_i32_0 : i32, i32
  }
  func.func @transform_2(%arg0: i32, %arg1: i32) -> (i32, i32) {
    %c0_i32 = arith.constant 0 : i32
    %c0_i32_0 = arith.constant 0 : i32
    %c0_i32_1 = arith.constant 0 : i32
    return %c0_i32, %c0_i32_0 : i32, i32
  }
  func.func @transform_3(%arg0: i32, %arg1: i32) -> (i32, i32) {
    %c0_i32 = arith.constant 0 : i32
    %c0_i32_0 = arith.constant 0 : i32
    %c0_i32_1 = arith.constant 0 : i32
    return %c0_i32, %c0_i32_0 : i32, i32
  }
  func.func @transform_4(%arg0: i32, %arg1: i32) -> (i32, i32) {
    %c0_i32 = arith.constant 0 : i32
    %c0_i32_0 = arith.constant 0 : i32
    %c0_i32_1 = arith.constant 0 : i32
    return %c0_i32, %c0_i32_0 : i32, i32
  }
  func.func @transform_5(%arg0: i32, %arg1: i32) -> (i32, i32) {
    %c0_i32 = arith.constant 0 : i32
    %c0_i32_0 = arith.constant 0 : i32
    %c0_i32_1 = arith.constant 0 : i32
    return %c0_i32, %c0_i32_0 : i32, i32
  }
  func.func @transform_6(%arg0: i32, %arg1: i32) -> (i32, i32) {
    %c0_i32 = arith.constant 0 : i32
    %c0_i32_0 = arith.constant 0 : i32
    %c0_i32_1 = arith.constant 0 : i32
    return %c0_i32, %c0_i32_0 : i32, i32
  }
  func.func @transform_7(%arg0: i32, %arg1: i32) -> (i32, i32, i32) {
    %c0_i32 = arith.constant 0 : i32
    %c0_i32_0 = arith.constant 0 : i32
    %c0_i32_1 = arith.constant 0 : i32
    return %arg0, %c0_i32, %c0_i32_0 : i32, i32, i32
  }
  func.func @transform_8(%arg0: i32, %arg1: i32) -> (i32, i32, i32) {
    %c0_i32 = arith.constant 0 : i32
    %c0_i32_0 = arith.constant 0 : i32
    %c0_i32_1 = arith.constant 0 : i32
    return %arg0, %c0_i32, %c0_i32_0 : i32, i32, i32
  }
}

</mosaic_0001>

<llo_original>
// kernel: tpu_custom_call.1
$region0: #{tpu_custom_call.1}
  #allocation0 [shape = 'u32[]', space=smem, size = 0x4, offset = 0x4, fixed_abs, tag = 'smem constant byte address 0x4 - core index']
  #allocation1 [shape = 'u32[144,128]{1,0:T(1,128)}', space=vmem, size = 0x12000, scoped, tag = 'internal scratch']
  #allocation2 [shape = 'f32[1,1]{1,0:T(1,128)}', space=vmem, size = 0x200, scoped, tag = 'scratch operand']
  #allocation3 [shape = 'f32[1,512]{1,0:T(1,128)}', space=vmem, size = 0x800, scoped, tag = 'scratch operand']
  #allocation4 [shape = 'f32[1,1]{1,0:T(1,128)S(1)}', space=vmem, size = 0x200, scoped, tag = 'scoped memory for tpu_custom_call.1']
  %s0 = inlined_call_operand.hbm [shape: f32[200,256], index: 0, kind: input, shape index: {}]
  %s1 = inlined_call_operand.hbm [shape: bf16[256,512], index: 1, kind: input, shape index: {}]
  %s2 = inlined_call_operand.vmem [shape: f32[1,512], index: 2, kind: input, shape index: {}]
  %s3 = inlined_call_operand.hbm [shape: bf16[512,128], index: 3, kind: input, shape index: {}]
  %s4 = inlined_call_operand.vmem [shape: f32[1,128], index: 4, kind: input, shape index: {}]
  %s5 = inlined_call_operand.vmem [shape: bf16[128,1], index: 5, kind: input, shape index: {}]
  %s6 = inlined_call_operand.<no memory space> [shape: f32[1,1], index: 6, kind: input, shape index: {}]
  %s7 = inlined_call_operand.hbm [shape: f32[2,1,512], index: 7, kind: output, shape index: {0}]
  %s8 = inlined_call_operand.vmem [shape: f32[2,1,1], index: 8, kind: output, shape index: {1}]
  %9 = xla_tuple %s7, %s8
  %s10 = sld [smem:[#allocation0]]
  $region89: #{tpu_custom_call.1} parent=0
    _
  %s12 = ssub.s32 1, %s10
  %s13 = scalar_select 0, %s12, %s10
  %v14 = vstv %s6
  %15 = vst [vmem:[#allocation4] sm:$0x1] %v14
  $region1: #{tpu_custom_call.1} parent=0
    #allocation5 [shape = 'u8[262144]{0}', space=vmem, size = 0x40000, scoped, tag = 'input window, operand 0']
    #allocation6 [shape = 's32[2]{0}', space=sflag, size = 0x8, scoped, tag = 'scoped memory for tpu_custom_call.1']
    #allocation7 [shape = 's32[2]{0}', space=sflag, size = 0x8, scoped, tag = 'scoped memory for tpu_custom_call.1']
    #allocation8 [shape = 'u8[262144]{0}', space=vmem, size = 0x40000, scoped, tag = 'input window, operand 1, single buffered']
    #allocation9 [shape = 's32[1]{0}', space=sflag, size = 0x4, scoped, tag = 'scoped memory for tpu_custom_call.1']
    #allocation10 [shape = 'u8[131072]{0}', space=vmem, size = 0x20000, scoped, tag = 'input window, operand 3, single buffered']
    #allocation11 [shape = 'u8[4096]{0}', space=vmem, size = 0x1000, scoped, tag = 'output window, operand 0']
    %16 = vsyncpa [#allocation6], 0
    %s17 = scalar_lea.sflag [#allocation6], 1
    %18 = vsyncpa %s17, 0
    %19 = vsyncpa [#allocation9], 0
    %20 = vsyncpa [#allocation7], 0
    %s21 = scalar_lea.sflag [#allocation7], 1
    %22 = vsyncpa %s21, 0
    loop: start=0, step=1, limit=4
    $region2: #{tpu_custom_call.1} parent=1 // loop_pre_header
      _
    $region3: #{tpu_custom_call.1} parent=1 // loop_header
      %s24 = sphi 0, %s28
      %p25 = scmp.ge.s32.totalorder %s24, 4
      %s31 = sphi 0, %s43
      %s32 = sphi 0, %s39
      %s33 = sphi 0, %s31
      %s34 = sphi 0, %s32
      %s35 = sphi 0, %s33
      %s36 = sphi 0, %s34
      %s48 = sphi 0, %s50
      %s51 = sphi 0, %s48
      %s52 = sphi 0, %s51
      %s68 = sphi 0, %s52
      %s72 = sphi 0, %s72
      %s74 = sphi 0, %s72
      %s75 = sphi 0, %s74
      %s89 = sphi 0, %s75
      %s93 = sphi 0, %s93
      %s95 = sphi 0, %s93
      %s96 = sphi 0, %s95
      %s110 = sphi 0, %s96
      %s114 = sphi 0, %s114
      %s116 = sphi 0, %s114
      %s117 = sphi 0, %s116
      %s131 = sphi 0, %s117
      %s135 = sphi 0, %s135
      %s137 = sphi 0, %s135
      %s138 = sphi 0, %s137
      %s152 = sphi 0, %s138
      %s156 = sphi 0, %s156
      %s158 = sphi 0, %s156
      %s159 = sphi 0, %s158
      %s173 = sphi 0, %s159
      %s177 = sphi 0, %s177
      %s179 = sphi 0, %s177
      %s180 = sphi 0, %s179
      %s194 = sphi 0, %s180
      %s200 = sphi 0, %s202
      %s203 = sphi 0, %s200
      %s204 = sphi 0, %s203
      %s220 = sphi 0, %s204
      %s226 = sphi 0, %s228
      %s229 = sphi 0, %s226
      %s230 = sphi 0, %s229
      %s246 = sphi 0, %s230
    $region4: #{tpu_custom_call.1} parent=1 // loop_header_branch
      %27 = sbr.rel (%p25) target = $region8
    $region5: #{tpu_custom_call.1} parent=1 // loop_body
      %s29 = ssub.s32 %s24, 1
      %s30 = ssub.s32 %s24, 2
      %s37 = sadd.s32 1, %s32
      %p38 = scmp.ge.s32.totalorder %s37, 1
      %s39 = scalar_select %p38, 0, %s37
      %s40 = sadd.s32 1, %s31
      %s41 = scalar_select %p38, %s40, %s31
      %p42 = scmp.ge.s32.totalorder %s41, 2
      %s43 = scalar_select %p42, 0, %s41
      %s44 = sadd.s32 %s31, %s32
      %s45 = sadd.s32 %s43, %s39
      %s46 = ssub.s32 %s44, %s45
      %p47 = scmp.eq.s32.totalorder %s46, 0
      %s49 = sadd.s32 %s48, 1
      %s50 = scalar_select %p47, %s48, %s49
      %p53 = pneg %p47
      %p54 = scmp.eq.s32.totalorder %s24, 1
      %p55 = por %p53, %p54
      %p56 = scmp.ne.s32.totalorder %s48, %s51
      %p57 = scmp.eq.s32.totalorder %s24, 0
      %p58 = por %p56, %p57
      %p59 = scmp.ne.s32.totalorder %s48, %s51
      %p60 = scmp.eq.s32.totalorder %s29, 1
      %p61 = por %p59, %p60
      %p62 = scmp.ne.s32.totalorder %s51, %s52
      %p63 = scmp.eq.s32.totalorder %s29, 0
      %p64 = por %p62, %p63
      %p65 = scmp.ne.s32.totalorder %s51, %s52
      %p66 = scmp.eq.s32.totalorder %s30, 1
      %p67 = por %p65, %p66
      %p69 = scmp.ne.s32.totalorder %s52, %s68
      %p70 = scmp.eq.s32.totalorder %s30, 0
      %p71 = por %p69, %p70
      %s73 = sadd.s32 %s72, 1
      %p76 = scmp.eq.s32.totalorder %s24, 1
      %p77 = scmp.ne.s32.totalorder %s72, %s74
      %p78 = scmp.eq.s32.totalorder %s24, 0
      %p79 = por %p77, %p78
      %p80 = scmp.ne.s32.totalorder %s72, %s74
      %p81 = scmp.eq.s32.totalorder %s29, 1
      %p82 = por %p80, %p81
      %p83 = scmp.ne.s32.totalorder %s74, %s75
      %p84 = scmp.eq.s32.totalorder %s29, 0
      %p85 = por %p83, %p84
      %p86 = scmp.ne.s32.totalorder %s74, %s75
      %p87 = scmp.eq.s32.totalorder %s30, 1
      %p88 = por %p86, %p87
      %p90 = scmp.ne.s32.totalorder %s75, %s89
      %p91 = scmp.eq.s32.totalorder %s30, 0
      %p92 = por %p90, %p91
      %s94 = sadd.s32 %s93, 1
      %p97 = scmp.eq.s32.totalorder %s24, 1
      %p98 = scmp.ne.s32.totalorder %s93, %s95
      %p99 = scmp.eq.s32.totalorder %s24, 0
      %p100 = por %p98, %p99
      %p101 = scmp.ne.s32.totalorder %s93, %s95
      %p102 = scmp.eq.s32.totalorder %s29, 1
      %p103 = por %p101, %p102
      %p104 = scmp.ne.s32.totalorder %s95, %s96
      %p105 = scmp.eq.s32.totalorder %s29, 0
      %p106 = por %p104, %p105
      %p107 = scmp.ne.s32.totalorder %s95, %s96
      %p108 = scmp.eq.s32.totalorder %s30, 1
      %p109 = por %p107, %p108
      %p111 = scmp.ne.s32.totalorder %s96, %s110
      %p112 = scmp.eq.s32.totalorder %s30, 0
      %p113 = por %p111, %p112
      %s115 = sadd.s32 %s114, 1
      %p118 = scmp.eq.s32.totalorder %s24, 1
      %p119 = scmp.ne.s32.totalorder %s114, %s116
      %p120 = scmp.eq.s32.totalorder %s24, 0
      %p121 = por %p119, %p120
      %p122 = scmp.ne.s32.totalorder %s114, %s116
      %p123 = scmp.eq.s32.totalorder %s29, 1
      %p124 = por %p122, %p123
      %p125 = scmp.ne.s32.totalorder %s116, %s117
      %p126 = scmp.eq.s32.totalorder %s29, 0
      %p127 = por %p125, %p126
      %p128 = scmp.ne.s32.totalorder %s116, %s117
      %p129 = scmp.eq.s32.totalorder %s30, 1
      %p130 = por %p128, %p129
      %p132 = scmp.ne.s32.totalorder %s117, %s131
      %p133 = scmp.eq.s32.totalorder %s30, 0
      %p134 = por %p132, %p133
      %s136 = sadd.s32 %s135, 1
      %p139 = scmp.eq.s32.totalorder %s24, 1
      %p140 = scmp.ne.s32.totalorder %s135, %s137
      %p141 = scmp.eq.s32.totalorder %s24, 0
      %p142 = por %p140, %p141
      %p143 = scmp.ne.s32.totalorder %s135, %s137
      %p144 = scmp.eq.s32.totalorder %s29, 1
      %p145 = por %p143, %p144
      %p146 = scmp.ne.s32.totalorder %s137, %s138
      %p147 = scmp.eq.s32.totalorder %s29, 0
      %p148 = por %p146, %p147
      %p149 = scmp.ne.s32.totalorder %s137, %s138
      %p150 = scmp.eq.s32.totalorder %s30, 1
      %p151 = por %p149, %p150
      %p153 = scmp.ne.s32.totalorder %s138, %s152
      %p154 = scmp.eq.s32.totalorder %s30, 0
      %p155 = por %p153, %p154
      %s157 = sadd.s32 %s156, 1
      %p160 = scmp.eq.s32.totalorder %s24, 1
      %p161 = scmp.ne.s32.totalorder %s156, %s158
      %p162 = scmp.eq.s32.totalorder %s24, 0
      %p163 = por %p161, %p162
      %p164 = scmp.ne.s32.totalorder %s156, %s158
      %p165 = scmp.eq.s32.totalorder %s29, 1
      %p166 = por %p164, %p165
      %p167 = scmp.ne.s32.totalorder %s158, %s159
      %p168 = scmp.eq.s32.totalorder %s29, 0
      %p169 = por %p167, %p168
      %p170 = scmp.ne.s32.totalorder %s158, %s159
      %p171 = scmp.eq.s32.totalorder %s30, 1
      %p172 = por %p170, %p171
      %p174 = scmp.ne.s32.totalorder %s159, %s173
      %p175 = scmp.eq.s32.totalorder %s30, 0
      %p176 = por %p174, %p175
      %s178 = sadd.s32 %s177, 1
      %p181 = scmp.eq.s32.totalorder %s24, 1
      %p182 = scmp.ne.s32.totalorder %s177, %s179
      %p183 = scmp.eq.s32.totalorder %s24, 0
      %p184 = por %p182, %p183
      %p185 = scmp.ne.s32.totalorder %s177, %s179
      %p186 = scmp.eq.s32.totalorder %s29, 1
      %p187 = por %p185, %p186
      %p188 = scmp.ne.s32.totalorder %s179, %s180
      %p189 = scmp.eq.s32.totalorder %s29, 0
      %p190 = por %p188, %p189
      %p191 = scmp.ne.s32.totalorder %s179, %s180
      %p192 = scmp.eq.s32.totalorder %s30, 1
      %p193 = por %p191, %p192
      %p195 = scmp.ne.s32.totalorder %s180, %s194
      %p196 = scmp.eq.s32.totalorder %s30, 0
      %p197 = por %p195, %p196
      %s198 = ssub.s32 %s31, %s43
      %p199 = scmp.eq.s32.totalorder %s198, 0
      %s201 = sadd.s32 %s200, 1
      %s202 = scalar_select %p199, %s200, %s201
      %p205 = pneg %p199
      %p206 = scmp.eq.s32.totalorder %s24, 1
      %p207 = por %p205, %p206
      %p208 = scmp.ne.s32.totalorder %s200, %s203
      %p209 = scmp.eq.s32.totalorder %s24, 0
      %p210 = por %p208, %p209
      %p211 = scmp.ne.s32.totalorder %s200, %s203
      %p212 = scmp.eq.s32.totalorder %s29, 1
      %p213 = por %p211, %p212
      %p214 = scmp.ne.s32.totalorder %s203, %s204
      %p215 = scmp.eq.s32.totalorder %s29, 0
      %p216 = por %p214, %p215
      %p217 = scmp.ne.s32.totalorder %s203, %s204
      %p218 = scmp.eq.s32.totalorder %s30, 1
      %p219 = por %p217, %p218
      %p221 = scmp.ne.s32.totalorder %s204, %s220
      %p222 = scmp.eq.s32.totalorder %s30, 0
      %p223 = por %p221, %p222
      %s224 = ssub.s32 %s31, %s43
      %p225 = scmp.eq.s32.totalorder %s224, 0
      %s227 = sadd.s32 %s226, 1
      %s228 = scalar_select %p225, %s226, %s227
      %p231 = pneg %p225
      %p232 = scmp.eq.s32.totalorder %s24, 1
      %p233 = por %p231, %p232
      %p234 = scmp.ne.s32.totalorder %s226, %s229
      %p235 = scmp.eq.s32.totalorder %s24, 0
      %p236 = por %p234, %p235
      %p237 = scmp.ne.s32.totalorder %s226, %s229
      %p238 = scmp.eq.s32.totalorder %s29, 1
      %p239 = por %p237, %p238
      %p240 = scmp.ne.s32.totalorder %s229, %s230
      %p241 = scmp.eq.s32.totalorder %s29, 0
      %p242 = por %p240, %p241
      %p243 = scmp.ne.s32.totalorder %s229, %s230
      %p244 = scmp.eq.s32.totalorder %s30, 1
      %p245 = por %p243, %p244
      %p247 = scmp.ne.s32.totalorder %s230, %s246
      %p248 = scmp.eq.s32.totalorder %s30, 0
      %p249 = por %p247, %p248
      %p250 = scmp.le.s32.totalorder 1, %s24
      %p251 = scmp.lt.s32.totalorder %s24, 3
      %p252 = pnand %p250, %p251
      %p253 = pneg %p252
      // Predicated region
      $region9: #{tpu_custom_call.1} parent=5 // pred_check
        _
      $region10: #{tpu_custom_call.1} parent=5 // pred_check_branch
        %255 = sbr.rel (%p252) target = $region12
      $region11: #{tpu_custom_call.1} parent=5 // pred_region
        %s256 = ssub.s32 %s24, 1
        // Predicated region
        $region13: #{tpu_custom_call.1} parent=11 // pred_check
          %p257 = pneg %p85
        $region14: #{tpu_custom_call.1} parent=11 // pred_check_branch
          %259 = sbr.rel (%p257) target = $region16
        $region15: #{tpu_custom_call.1} parent=11 // pred_region
          %s261 = ssub.s32 8192, 8192
          %262 = vsyncadd [#allocation9], %s261
          %s263 = sshll.u32 [#allocation8], 4
          %s264 = int_to_ptr.vmem [resolvable:$true] %s263
          %269 = dma.hbm_to_vmem [thread:$0]  %s1, 8192, %s264, [#allocation9], 256, 256, 16
        $region16: #{tpu_custom_call.1} parent=11 // pred_fallthru
          _
        // Predicated region
        $region17: #{tpu_custom_call.1} parent=11 // pred_check
          %p270 = pneg %p106
        $region18: #{tpu_custom_call.1} parent=11 // pred_check_branch
          %272 = sbr.rel (%p270) target = $region20
        $region19: #{tpu_custom_call.1} parent=11 // pred_region
          _
        $region20: #{tpu_custom_call.1} parent=11 // pred_fallthru
          _
        // Predicated region
        $region21: #{tpu_custom_call.1} parent=11 // pred_check
          %p273 = pneg %p127
        $region22: #{tpu_custom_call.1} parent=11 // pred_check_branch
          %275 = sbr.rel (%p273) target = $region24
        $region23: #{tpu_custom_call.1} parent=11 // pred_region
          %s277 = ssub.s32 4096, 4096
          %278 = vsyncadd [#allocation9], %s277
          %s279 = sshll.u32 [#allocation10], 4
          %s280 = int_to_ptr.vmem [resolvable:$true] %s279
          %285 = dma.hbm_to_vmem [thread:$0]  %s3, 4096, %s280, [#allocation9], 64, 64, 4
        $region24: #{tpu_custom_call.1} parent=11 // pred_fallthru
          _
        // Predicated region
        $region25: #{tpu_custom_call.1} parent=11 // pred_check
          %p286 = pneg %p148
        $region26: #{tpu_custom_call.1} parent=11 // pred_check_branch
          %288 = sbr.rel (%p286) target = $region28
        $region27: #{tpu_custom_call.1} parent=11 // pred_region
          _
        $region28: #{tpu_custom_call.1} parent=11 // pred_fallthru
          _
        // Predicated region
        $region29: #{tpu_custom_call.1} parent=11 // pred_check
          %p289 = pneg %p169
        $region30: #{tpu_custom_call.1} parent=11 // pred_check_branch
          %291 = sbr.rel (%p289) target = $region32
        $region31: #{tpu_custom_call.1} parent=11 // pred_region
          _
        $region32: #{tpu_custom_call.1} parent=11 // pred_fallthru
          _
        // Predicated region
        $region33: #{tpu_custom_call.1} parent=11 // pred_check
          %p292 = pneg %p190
        $region34: #{tpu_custom_call.1} parent=11 // pred_check_branch
          %294 = sbr.rel (%p292) target = $region36
        $region35: #{tpu_custom_call.1} parent=11 // pred_region
          _
        $region36: #{tpu_custom_call.1} parent=11 // pred_fallthru
          _
      $region12: #{tpu_custom_call.1} parent=5 // pred_fallthru
        _
      %p295 = scmp.lt.s32.totalorder %s24, 2
      // Predicated region
      $region37: #{tpu_custom_call.1} parent=5 // pred_check
        %p296 = pneg %p295
      $region38: #{tpu_custom_call.1} parent=5 // pred_check_branch
        %298 = sbr.rel (%p296) target = $region40
      $region39: #{tpu_custom_call.1} parent=5 // pred_region
        // Predicated region
        $region41: #{tpu_custom_call.1} parent=39 // pred_check
          %p299 = pneg %p58
        $region42: #{tpu_custom_call.1} parent=39 // pred_check_branch
          %301 = sbr.rel (%p299) target = $region44
        $region43: #{tpu_custom_call.1} parent=39 // pred_region
          %s302 = sand.u32 %s48, 1
          %s303 = scalar_lea.sflag [#allocation6], %s302
          %s304 = sand.u32 %s48, 1
          %s305 = smul.addr %s304, 256
          %s306 = scalar_lea.vmem [#allocation5], %s305
          %s307 = sadd.s32 %s31, %s32
          %s308 = smul.u32 16, %s307
          %s309 = ssub.s32 25, %s308
          %p310 = scmp.lt.s32.totalorder %s309, 16
          %s311 = scalar_select %p310, %s309, 16
          %s312 = smul.u32 128, %s311
          %s313 = smul.u32 %s312, 2
          %s315 = ssub.s32 4096, %s313
          %316 = vsyncadd %s303, %s315
          %p317 = scmp.ne.s32.totalorder 0, %s313
          %s318 = smul.addr %s308, 2
          %s319 = smul.addr %s318, 128
          %s320 = scalar_lea.hbm %s0, %s319
          %s321 = smul.u32 16, %s311
          %s322 = sshll.u32 %s306, 4
          %s323 = int_to_ptr.vmem [resolvable:$true] %s322
          %s324 = sshll.u32 %s321, 4
          %328 = dma.hbm_to_vmem [thread:$0]  (%p317), %s320, %s324, %s323, %s303, 256, 256, 16
        $region44: #{tpu_custom_call.1} parent=39 // pred_fallthru
          _
      $region40: #{tpu_custom_call.1} parent=5 // pred_fallthru
        _
      %p329 = scmp.le.s32.totalorder 1, %s24
      %p330 = scmp.lt.s32.totalorder %s24, 3
      %p331 = pnand %p329, %p330
      %p332 = pneg %p331
      // Predicated region
      $region45: #{tpu_custom_call.1} parent=5 // pred_check
        _
      $region46: #{tpu_custom_call.1} parent=5 // pred_check_branch
        %334 = sbr.rel (%p331) target = $region48
      $region47: #{tpu_custom_call.1} parent=5 // pred_region
        %s335 = ssub.s32 %s24, 1
        %s336 = sand.u32 %s51, 1
        %s337 = scalar_lea.sflag [#allocation6], %s336
        %s338 = sand.u32 %s51, 1
        %s339 = smul.addr %s338, 256
        %s340 = scalar_lea.vmem [#allocation5], %s339
        // Predicated region
        $region49: #{tpu_custom_call.1} parent=47 // pred_check
          %p341 = pneg %p64
        $region50: #{tpu_custom_call.1} parent=47 // pred_check_branch
          %343 = sbr.rel (%p341) target = $region52
        $region51: #{tpu_custom_call.1} parent=47 // pred_region
          %344 = dma.done %s337, 4096
        $region52: #{tpu_custom_call.1} parent=47 // pred_fallthru
          _
        // Predicated region
        $region53: #{tpu_custom_call.1} parent=47 // pred_check
          %p345 = pneg %p85
        $region54: #{tpu_custom_call.1} parent=47 // pred_check_branch
          %347 = sbr.rel (%p345) target = $region56
        $region55: #{tpu_custom_call.1} parent=47 // pred_region
          %348 = dma.done [#allocation9], 8192
        $region56: #{tpu_custom_call.1} parent=47 // pred_fallthru
          _
        // Predicated region
        $region57: #{tpu_custom_call.1} parent=47 // pred_check
          %p349 = pneg %p127
        $region58: #{tpu_custom_call.1} parent=47 // pred_check_branch
          %351 = sbr.rel (%p349) target = $region60
        $region59: #{tpu_custom_call.1} parent=47 // pred_region
          %352 = dma.done [#allocation9], 4096
        $region60: #{tpu_custom_call.1} parent=47 // pred_fallthru
          _
        %s353 = sand.u32 %s51, 1
        %s354 = scalar_lea.sflag [#allocation6], %s353
        %s355 = sand.u32 %s51, 1
        %s356 = smul.addr %s355, 256
        %s357 = scalar_lea.vmem [#allocation5], %s356
        %p358 = pneg %p64
        %p359 = pneg %p61
        %p360 = pneg %p85
        %p361 = pneg %p82
        %p362 = pneg %p106
        %p363 = pneg %p103
        %p364 = pneg %p127
        %p365 = pneg %p124
        %p366 = pneg %p148
        %p367 = pneg %p145
        %p368 = pneg %p169
        %p369 = pneg %p166
        %p370 = pneg %p190
        %p371 = pneg %p187
        %p372 = pneg %p216
        %p373 = pneg %p213
        %s374 = sand.u32 %s203, 1
        %s375 = scalar_lea.sflag [#allocation7], %s374
        %s376 = sand.u32 %s203, 1
        %s377 = smul.addr %s376, 4
        %s378 = scalar_lea.vmem [#allocation11], %s377
        %p379 = pneg %p242
        %p380 = pneg %p239
        %p381 = scmp.lt.s32.totalorder %s33, 1
        %s382 = scalar_select %p381, %s33, 1
        %s383 = scalar_lea.vmem %s8, %s382
        %s384 = sadd.s32 %s33, %s34
        %s385 = smul.u32 16, %s384
        %s386 = ssub.s32 25, %s385
        %p387 = scmp.lt.s32.totalorder %s386, 16
        %s388 = scalar_select %p387, %s386, 16
        %s389 = smul.u32 128, %s388
        %s390 = smul.u32 %s389, 2
        %p391 = scmp.lt.s32.totalorder %s33, 1
        %s392 = scalar_select %p391, %s33, 1
        %s393 = scalar_lea.vmem %s8, %s392
        %p395 = scmp.eq.s32.totalorder %s34, 0
        // Predicated region
        $region61: #{tpu_custom_call.1} parent=47 // pred_check
          %p396 = pneg %p395
        $region62: #{tpu_custom_call.1} parent=47 // pred_check_branch
          %398 = sbr.rel (%p396) target = $region64
        $region63: #{tpu_custom_call.1} parent=47 // pred_region
          %vm399 = vcmask 0
          %400 = vst.msk [vmem:[#allocation2] sm:$0x1] %vm399, -1e+30
          %v401 = vlaneseq
          %vm402 = vcmp.ge.s32.totalorder %v401, 0
          %vm403 = vcmp.lt.s32.totalorder %v401, 512
          %vm404 = vmand %vm402, %vm403
          %405 = vst.msk [vmem:[#allocation3] sm:$0xf] %vm404, 0.0
        $region64: #{tpu_custom_call.1} parent=47 // pred_fallthru
          _
        %v406 = vlaneseq
        %v407 = vshrl.u32 %v406, 7
        %v408 = vadd.s32 %v407, 8
        %v409 = vadd.s32 %v407, 16
        %v410 = vadd.s32 %v407, 24
        %v411 = vadd.s32 %v407, 32
        %v412 = vadd.s32 %v407, 40
        %v413 = vadd.s32 %v407, 48
        %v414 = vadd.s32 %v407, 56
        %v415 = vadd.s32 %v407, 64
        %v416 = vadd.s32 %v407, 72
        %v417 = vadd.s32 %v407, 80
        %v418 = vadd.s32 %v407, 88
        %v419 = vadd.s32 %v407, 96
        %v420 = vadd.s32 %v407, 104
        %v421 = vadd.s32 %v407, 112
        %v422 = vadd.s32 %v407, 120
        %s423 = sadd.s32 %s33, %s34
        %s424 = smul.u32 %s423, 128
        %v425 = vstv %s424
        %v426 = vadd.s32 %v407, %v425
        %v427 = vadd.s32 %v408, %v425
        %v428 = vadd.s32 %v409, %v425
        %v429 = vadd.s32 %v410, %v425
        %v430 = vadd.s32 %v411, %v425
        %v431 = vadd.s32 %v412, %v425
        %v432 = vadd.s32 %v413, %v425
        %v433 = vadd.s32 %v414, %v425
        %v434 = vadd.s32 %v415, %v425
        %v435 = vadd.s32 %v416, %v425
        %v436 = vadd.s32 %v417, %v425
        %v437 = vadd.s32 %v418, %v425
        %v438 = vadd.s32 %v419, %v425
        %v439 = vadd.s32 %v420, %v425
        %v440 = vadd.s32 %v421, %v425
        %v441 = vadd.s32 %v422, %v425
        %vm442 = vcmp.lt.s32.totalorder %v426, 200
        %vm443 = vcmp.lt.s32.totalorder %v427, 200
        %vm444 = vcmp.lt.s32.totalorder %v428, 200
        %vm445 = vcmp.lt.s32.totalorder %v429, 200
        %vm446 = vcmp.lt.s32.totalorder %v430, 200
        %vm447 = vcmp.lt.s32.totalorder %v431, 200
        %vm448 = vcmp.lt.s32.totalorder %v432, 200
        %vm449 = vcmp.lt.s32.totalorder %v433, 200
        %vm450 = vcmp.lt.s32.totalorder %v434, 200
        %vm451 = vcmp.lt.s32.totalorder %v435, 200
        %vm452 = vcmp.lt.s32.totalorder %v436, 200
        %vm453 = vcmp.lt.s32.totalorder %v437, 200
        %vm454 = vcmp.lt.s32.totalorder %v438, 200
        %vm455 = vcmp.lt.s32.totalorder %v439, 200
        %vm456 = vcmp.lt.s32.totalorder %v440, 200
        %vm457 = vcmp.lt.s32.totalorder %v441, 200
        %v458 = vld [vmem:[%s340] sm:$0xff]
        %v459 = vld [vmem:[%s340 + $0x8] sm:$0xff]
        %v460 = vld [vmem:[%s340 + $0x10] sm:$0xff]
        %v461 = vld [vmem:[%s340 + $0x18] sm:$0xff]
        %v462 = vld [vmem:[%s340 + $0x20] sm:$0xff]
        %v463 = vld [vmem:[%s340 + $0x28] sm:$0xff]
        %v464 = vld [vmem:[%s340 + $0x30] sm:$0xff]
        %v465 = vld [vmem:[%s340 + $0x38] sm:$0xff]
        %v466 = vld [vmem:[%s340 + $0x40] sm:$0xff]
        %v467 = vld [vmem:[%s340 + $0x48] sm:$0xff]
        %v468 = vld [vmem:[%s340 + $0x50] sm:$0xff]
        %v469 = vld [vmem:[%s340 + $0x58] sm:$0xff]
        %v470 = vld [vmem:[%s340 + $0x60] sm:$0xff]
        %v471 = vld [vmem:[%s340 + $0x68] sm:$0xff]
        %v472 = vld [vmem:[%s340 + $0x70] sm:$0xff]
        %v473 = vld [vmem:[%s340 + $0x78] sm:$0xff]
        %v474 = vld [vmem:[%s340 + $0x80] sm:$0xff]
        %v475 = vld [vmem:[%s340 + $0x88] sm:$0xff]
        %v476 = vld [vmem:[%s340 + $0x90] sm:$0xff]
        %v477 = vld [vmem:[%s340 + $0x98] sm:$0xff]
        %v478 = vld [vmem:[%s340 + $0xa0] sm:$0xff]
        %v479 = vld [vmem:[%s340 + $0xa8] sm:$0xff]
        %v480 = vld [vmem:[%s340 + $0xb0] sm:$0xff]
        %v481 = vld [vmem:[%s340 + $0xb8] sm:$0xff]
        %v482 = vld [vmem:[%s340 + $0xc0] sm:$0xff]
        %v483 = vld [vmem:[%s340 + $0xc8] sm:$0xff]
        %v484 = vld [vmem:[%s340 + $0xd0] sm:$0xff]
        %v485 = vld [vmem:[%s340 + $0xd8] sm:$0xff]
        %v486 = vld [vmem:[%s340 + $0xe0] sm:$0xff]
        %v487 = vld [vmem:[%s340 + $0xe8] sm:$0xff]
        %v488 = vld [vmem:[%s340 + $0xf0] sm:$0xff]
        %v489 = vld [vmem:[%s340 + $0xf8] sm:$0xff]
        %v490 = vpack.c.bf16 %v460, %v458
        %v491 = vpack.c.bf16 %v461, %v459
        %v492 = vpack.c.bf16 %v464, %v462
        %v493 = vpack.c.bf16 %v465, %v463
        %v494 = vpack.c.bf16 %v468, %v466
        %v495 = vpack.c.bf16 %v469, %v467
        %v496 = vpack.c.bf16 %v472, %v470
        %v497 = vpack.c.bf16 %v473, %v471
        %v498 = vpack.c.bf16 %v476, %v474
        %v499 = vpack.c.bf16 %v477, %v475
        %v500 = vpack.c.bf16 %v480, %v478
        %v501 = vpack.c.bf16 %v481, %v479
        %v502 = vpack.c.bf16 %v484, %v482
        %v503 = vpack.c.bf16 %v485, %v483
        %v504 = vpack.c.bf16 %v488, %v486
        %v505 = vpack.c.bf16 %v489, %v487
        %v506 = vld [vmem:[#allocation8] sm:$0xff]
        %v507 = vld [vmem:[#allocation8 + $0x8] sm:$0xff]
        %v508 = vld [vmem:[#allocation8 + $0x10] sm:$0xff]
        %v509 = vld [vmem:[#allocation8 + $0x18] sm:$0xff]
        %v510 = vld [vmem:[#allocation8 + $0x20] sm:$0xff]
        %v511 = vld [vmem:[#allocation8 + $0x28] sm:$0xff]
        %v512 = vld [vmem:[#allocation8 + $0x30] sm:$0xff]
        %v513 = vld [vmem:[#allocation8 + $0x38] sm:$0xff]
        %v514 = vld [vmem:[#allocation8 + $0x40] sm:$0xff]
        %v515 = vld [vmem:[#allocation8 + $0x48] sm:$0xff]
        %v516 = vld [vmem:[#allocation8 + $0x50] sm:$0xff]
        %v517 = vld [vmem:[#allocation8 + $0x58] sm:$0xff]
        %v518 = vld [vmem:[#allocation8 + $0x60] sm:$0xff]
        %v519 = vld [vmem:[#allocation8 + $0x68] sm:$0xff]
        %v520 = vld [vmem:[#allocation8 + $0x70] sm:$0xff]
        %v521 = vld [vmem:[#allocation8 + $0x78] sm:$0xff]
        %v522 = vld [vmem:[#allocation8 + $0x80] sm:$0xff]
        %v523 = vld [vmem:[#allocation8 + $0x88] sm:$0xff]
        %v524 = vld [vmem:[#allocation8 + $0x90] sm:$0xff]
        %v525 = vld [vmem:[#allocation8 + $0x98] sm:$0xff]
        %v526 = vld [vmem:[#allocation8 + $0xa0] sm:$0xff]
        %v527 = vld [vmem:[#allocation8 + $0xa8] sm:$0xff]
        %v528 = vld [vmem:[#allocation8 + $0xb0] sm:$0xff]
        %v529 = vld [vmem:[#allocation8 + $0xb8] sm:$0xff]
        %v530 = vld [vmem:[#allocation8 + $0xc0] sm:$0xff]
        %v531 = vld [vmem:[#allocation8 + $0xc8] sm:$0xff]
        %v532 = vld [vmem:[#allocation8 + $0xd0] sm:$0xff]
        %v533 = vld [vmem:[#allocation8 + $0xd8] sm:$0xff]
        %v534 = vld [vmem:[#allocation8 + $0xe0] sm:$0xff]
        %v535 = vld [vmem:[#allocation8 + $0xe8] sm:$0xff]
        %v536 = vld [vmem:[#allocation8 + $0xf0] sm:$0xff]
        %v537 = vld [vmem:[#allocation8 + $0xf8] sm:$0xff]
        %v538 = vld [vmem:[#allocation8 + $0x100] sm:$0xff]
        %v539 = vld [vmem:[#allocation8 + $0x108] sm:$0xff]
        %v540 = vld [vmem:[#allocation8 + $0x110] sm:$0xff]
        %v541 = vld [vmem:[#allocation8 + $0x118] sm:$0xff]
        %v542 = vld [vmem:[#allocation8 + $0x120] sm:$0xff]
        %v543 = vld [vmem:[#allocation8 + $0x128] sm:$0xff]
        %v544 = vld [vmem:[#allocation8 + $0x130] sm:$0xff]
        %v545 = vld [vmem:[#allocation8 + $0x138] sm:$0xff]
        %v546 = vld [vmem:[#allocation8 + $0x140] sm:$0xff]
        %v547 = vld [vmem:[#allocation8 + $0x148] sm:$0xff]
        %v548 = vld [vmem:[#allocation8 + $0x150] sm:$0xff]
        %v549 = vld [vmem:[#allocation8 + $0x158] sm:$0xff]
        %v550 = vld [vmem:[#allocation8 + $0x160] sm:$0xff]
        %v551 = vld [vmem:[#allocation8 + $0x168] sm:$0xff]
        %v552 = vld [vmem:[#allocation8 + $0x170] sm:$0xff]
        %v553 = vld [vmem:[#allocation8 + $0x178] sm:$0xff]
        %v554 = vld [vmem:[#allocation8 + $0x180] sm:$0xff]
        %v555 = vld [vmem:[#allocation8 + $0x188] sm:$0xff]
        %v556 = vld [vmem:[#allocation8 + $0x190] sm:$0xff]
        %v557 = vld [vmem:[#allocation8 + $0x198] sm:$0xff]
        %v558 = vld [vmem:[#allocation8 + $0x1a0] sm:$0xff]
        %v559 = vld [vmem:[#allocation8 + $0x1a8] sm:$0xff]
        %v560 = vld [vmem:[#allocation8 + $0x1b0] sm:$0xff]
        %v561 = vld [vmem:[#allocation8 + $0x1b8] sm:$0xff]
        %v562 = vld [vmem:[#allocation8 + $0x1c0] sm:$0xff]
        %v563 = vld [vmem:[#allocation8 + $0x1c8] sm:$0xff]
        %v564 = vld [vmem:[#allocation8 + $0x1d0] sm:$0xff]
        %v565 = vld [vmem:[#allocation8 + $0x1d8] sm:$0xff]
        %v566 = vld [vmem:[#allocation8 + $0x1e0] sm:$0xff]
        %v567 = vld [vmem:[#allocation8 + $0x1e8] sm:$0xff]
        %v568 = vld [vmem:[#allocation8 + $0x1f0] sm:$0xff]
        %v569 = vld [vmem:[#allocation8 + $0x1f8] sm:$0xff]
        %v570 = vld [vmem:[%s2] sm:$0xf]
        %v572 = vlaneseq
        %v573 = vshrl.u32 %v572, 7
        %v574 = vsub.s32 0, %v573
        %v575 = vrot.slane %v570, %v574
        %v576 = vlaneseq
        %v577 = vshrl.u32 %v576, 7
        %v578 = vsub.s32 1, %v577
        %v579 = vrot.slane %v570, %v578
        %v580 = vlaneseq
        %v581 = vshrl.u32 %v580, 7
        %v582 = vsub.s32 2, %v581
        %v583 = vrot.slane %v570, %v582
        %v584 = vlaneseq
        %v585 = vshrl.u32 %v584, 7
        %v586 = vsub.s32 3, %v585
        %v587 = vrot.slane %v570, %v586
        %v656 = vunpack.c.l.b16 %v506
        %v657 = vunpack.c.h.b16 %v506
        %v658 = vunpack.c.l.b16 %v507
        %v659 = vunpack.c.h.b16 %v507
        %v660 = vunpack.c.l.b16 %v508
        %v661 = vunpack.c.h.b16 %v508
        %v662 = vunpack.c.l.b16 %v509
        %v663 = vunpack.c.h.b16 %v509
        %v664 = vunpack.c.l.b16 %v510
        %v665 = vunpack.c.h.b16 %v510
        %v666 = vunpack.c.l.b16 %v511
        %v667 = vunpack.c.h.b16 %v511
        %v668 = vunpack.c.l.b16 %v512
        %v669 = vunpack.c.h.b16 %v512
        %v670 = vunpack.c.l.b16 %v513
        %v671 = vunpack.c.h.b16 %v513
        %v672 = vunpack.c.l.b16 %v514
        %v673 = vunpack.c.h.b16 %v514
        %v674 = vunpack.c.l.b16 %v515
        %v675 = vunpack.c.h.b16 %v515
        %v676 = vunpack.c.l.b16 %v516
        %v677 = vunpack.c.h.b16 %v516
        %v678 = vunpack.c.l.b16 %v517
        %v679 = vunpack.c.h.b16 %v517
        %v680 = vunpack.c.l.b16 %v518
        %v681 = vunpack.c.h.b16 %v518
        %v682 = vunpack.c.l.b16 %v519
        %v683 = vunpack.c.h.b16 %v519
        %v684 = vunpack.c.l.b16 %v520
        %v685 = vunpack.c.h.b16 %v520
        %v686 = vunpack.c.l.b16 %v521
        %v687 = vunpack.c.h.b16 %v521
        %v688 = vunpack.c.l.b16 %v522
        %v689 = vunpack.c.h.b16 %v522
        %v690 = vunpack.c.l.b16 %v523
        %v691 = vunpack.c.h.b16 %v523
        %v692 = vunpack.c.l.b16 %v524
        %v693 = vunpack.c.h.b16 %v524
        %v694 = vunpack.c.l.b16 %v525
        %v695 = vunpack.c.h.b16 %v525
        %v696 = vunpack.c.l.b16 %v526
        %v697 = vunpack.c.h.b16 %v526
        %v698 = vunpack.c.l.b16 %v527
        %v699 = vunpack.c.h.b16 %v527
        %v700 = vunpack.c.l.b16 %v528
        %v701 = vunpack.c.h.b16 %v528
        %v702 = vunpack.c.l.b16 %v529
        %v703 = vunpack.c.h.b16 %v529
        %v704 = vunpack.c.l.b16 %v530
        %v705 = vunpack.c.h.b16 %v530
        %v706 = vunpack.c.l.b16 %v531
        %v707 = vunpack.c.h.b16 %v531
        %v708 = vunpack.c.l.b16 %v532
        %v709 = vunpack.c.h.b16 %v532
        %v710 = vunpack.c.l.b16 %v533
        %v711 = vunpack.c.h.b16 %v533
        %v712 = vunpack.c.l.b16 %v534
        %v713 = vunpack.c.h.b16 %v534
        %v714 = vunpack.c.l.b16 %v535
        %v715 = vunpack.c.h.b16 %v535
        %v716 = vunpack.c.l.b16 %v536
        %v717 = vunpack.c.h.b16 %v536
        %v718 = vunpack.c.l.b16 %v537
        %v719 = vunpack.c.h.b16 %v537
        %v720 = vunpack.c.l.b16 %v538
        %v721 = vunpack.c.h.b16 %v538
        %v722 = vunpack.c.l.b16 %v539
        %v723 = vunpack.c.h.b16 %v539
        %v724 = vunpack.c.l.b16 %v540
        %v725 = vunpack.c.h.b16 %v540
        %v726 = vunpack.c.l.b16 %v541
        %v727 = vunpack.c.h.b16 %v541
        %v728 = vunpack.c.l.b16 %v542
        %v729 = vunpack.c.h.b16 %v542
        %v730 = vunpack.c.l.b16 %v543
        %v731 = vunpack.c.h.b16 %v543
        %v732 = vunpack.c.l.b16 %v544
        %v733 = vunpack.c.h.b16 %v544
        %v734 = vunpack.c.l.b16 %v545
        %v735 = vunpack.c.h.b16 %v545
        %v736 = vunpack.c.l.b16 %v546
        %v737 = vunpack.c.h.b16 %v546
        %v738 = vunpack.c.l.b16 %v547
        %v739 = vunpack.c.h.b16 %v547
        %v740 = vunpack.c.l.b16 %v548
        %v741 = vunpack.c.h.b16 %v548
        %v742 = vunpack.c.l.b16 %v549
        %v743 = vunpack.c.h.b16 %v549
        %v744 = vunpack.c.l.b16 %v550
        %v745 = vunpack.c.h.b16 %v550
        %v746 = vunpack.c.l.b16 %v551
        %v747 = vunpack.c.h.b16 %v551
        %v748 = vunpack.c.l.b16 %v552
        %v749 = vunpack.c.h.b16 %v552
        %v750 = vunpack.c.l.b16 %v553
        %v751 = vunpack.c.h.b16 %v553
        %v752 = vunpack.c.l.b16 %v554
        %v753 = vunpack.c.h.b16 %v554
        %v754 = vunpack.c.l.b16 %v555
        %v755 = vunpack.c.h.b16 %v555
        %v756 = vunpack.c.l.b16 %v556
        %v757 = vunpack.c.h.b16 %v556
        %v758 = vunpack.c.l.b16 %v557
        %v759 = vunpack.c.h.b16 %v557
        %v760 = vunpack.c.l.b16 %v558
        %v761 = vunpack.c.h.b16 %v558
        %v762 = vunpack.c.l.b16 %v559
        %v763 = vunpack.c.h.b16 %v559
        %v764 = vunpack.c.l.b16 %v560
        %v765 = vunpack.c.h.b16 %v560
        %v766 = vunpack.c.l.b16 %v561
        %v767 = vunpack.c.h.b16 %v561
        %v768 = vunpack.c.l.b16 %v562
        %v769 = vunpack.c.h.b16 %v562
        %v770 = vunpack.c.l.b16 %v563
        %v771 = vunpack.c.h.b16 %v563
        %v772 = vunpack.c.l.b16 %v564
        %v773 = vunpack.c.h.b16 %v564
        %v774 = vunpack.c.l.b16 %v565
        %v775 = vunpack.c.h.b16 %v565
        %v776 = vunpack.c.l.b16 %v566
        %v777 = vunpack.c.h.b16 %v566
        %v778 = vunpack.c.l.b16 %v567
        %v779 = vunpack.c.h.b16 %v567
        %v780 = vunpack.c.l.b16 %v568
        %v781 = vunpack.c.h.b16 %v568
        %v782 = vunpack.c.l.b16 %v569
        %v783 = vunpack.c.h.b16 %v569
        %v784 = vpack.c.b16 %v660, %v656
        %v785 = vpack.c.b16 %v661, %v657
        %v786 = vpack.c.b16 %v662, %v658
        %v787 = vpack.c.b16 %v663, %v659
        %v788 = vpack.c.b16 %v668, %v664
        %v789 = vpack.c.b16 %v669, %v665
        %v790 = vpack.c.b16 %v670, %v666
        %v791 = vpack.c.b16 %v671, %v667
        %v792 = vpack.c.b16 %v676, %v672
        %v793 = vpack.c.b16 %v677, %v673
        %v794 = vpack.c.b16 %v678, %v674
        %v795 = vpack.c.b16 %v679, %v675
        %v796 = vpack.c.b16 %v684, %v680
        %v797 = vpack.c.b16 %v685, %v681
        %v798 = vpack.c.b16 %v686, %v682
        %v799 = vpack.c.b16 %v687, %v683
        %v800 = vpack.c.b16 %v692, %v688
        %v801 = vpack.c.b16 %v693, %v689
        %v802 = vpack.c.b16 %v694, %v690
        %v803 = vpack.c.b16 %v695, %v691
        %v804 = vpack.c.b16 %v700, %v696
        %v805 = vpack.c.b16 %v701, %v697
        %v806 = vpack.c.b16 %v702, %v698
        %v807 = vpack.c.b16 %v703, %v699
        %v808 = vpack.c.b16 %v708, %v704
        %v809 = vpack.c.b16 %v709, %v705
        %v810 = vpack.c.b16 %v710, %v706
        %v811 = vpack.c.b16 %v711, %v707
        %v812 = vpack.c.b16 %v716, %v712
        %v813 = vpack.c.b16 %v717, %v713
        %v814 = vpack.c.b16 %v718, %v714
        %v815 = vpack.c.b16 %v719, %v715
        %v816 = vpack.c.b16 %v724, %v720
        %v817 = vpack.c.b16 %v725, %v721
        %v818 = vpack.c.b16 %v726, %v722
        %v819 = vpack.c.b16 %v727, %v723
        %v820 = vpack.c.b16 %v732, %v728
        %v821 = vpack.c.b16 %v733, %v729
        %v822 = vpack.c.b16 %v734, %v730
        %v823 = vpack.c.b16 %v735, %v731
        %v824 = vpack.c.b16 %v740, %v736
        %v825 = vpack.c.b16 %v741, %v737
        %v826 = vpack.c.b16 %v742, %v738
        %v827 = vpack.c.b16 %v743, %v739
        %v828 = vpack.c.b16 %v748, %v744
        %v829 = vpack.c.b16 %v749, %v745
        %v830 = vpack.c.b16 %v750, %v746
        %v831 = vpack.c.b16 %v751, %v747
        %v832 = vpack.c.b16 %v756, %v752
        %v833 = vpack.c.b16 %v757, %v753
        %v834 = vpack.c.b16 %v758, %v754
        %v835 = vpack.c.b16 %v759, %v755
        %v836 = vpack.c.b16 %v764, %v760
        %v837 = vpack.c.b16 %v765, %v761
        %v838 = vpack.c.b16 %v766, %v762
        %v839 = vpack.c.b16 %v767, %v763
        %v840 = vpack.c.b16 %v772, %v768
        %v841 = vpack.c.b16 %v773, %v769
        %v842 = vpack.c.b16 %v774, %v770
        %v843 = vpack.c.b16 %v775, %v771
        %v844 = vpack.c.b16 %v780, %v776
        %v845 = vpack.c.b16 %v781, %v777
        %v846 = vpack.c.b16 %v782, %v778
        %v847 = vpack.c.b16 %v783, %v779
        %912 = vmatprep.subr.bf16.mxu0 %v813
        %913 = vmatpush1.bf16.msra.mxu0 %v812
        %914 = vmatprep.subr.bf16.mxu0 %v809
        %915 = vmatpush1.bf16.msra.mxu0 %v808
        %916 = vmatprep.subr.bf16.mxu0 %v805
        %917 = vmatpush1.bf16.msra.mxu0 %v804
        %918 = vmatprep.subr.bf16.mxu0 %v801
        %919 = vmatpush1.bf16.msra.mxu0 %v800
        %920 = vmatprep.subr.bf16.mxu0 %v797
        %921 = vmatpush1.bf16.msra.mxu0 %v796
        %922 = vmatprep.subr.bf16.mxu0 %v793
        %923 = vmatpush1.bf16.msra.mxu0 %v792
        %924 = vmatprep.subr.bf16.mxu0 %v789
        %925 = vmatpush1.bf16.msra.mxu0 %v788
        %926 = vmatprep.subr.bf16.mxu0 %v785
        %927 = vmatpush1.bf16.msra.mxu0 %v784
        %928 = vmatprep.subr.bf16.mxu0 %v845
        %929 = vmatpush2.bf16.msra.mxu0 %v844
        %930 = vmatprep.subr.bf16.mxu0 %v841
        %931 = vmatpush2.bf16.msra.mxu0 %v840
        %932 = vmatprep.subr.bf16.mxu0 %v837
        %933 = vmatpush2.bf16.msra.mxu0 %v836
        %934 = vmatprep.subr.bf16.mxu0 %v833
        %935 = vmatpush2.bf16.msra.mxu0 %v832
        %936 = vmatprep.subr.bf16.mxu0 %v829
        %937 = vmatpush2.bf16.msra.mxu0 %v828
        %938 = vmatprep.subr.bf16.mxu0 %v825
        %939 = vmatpush2.bf16.msra.mxu0 %v824
        %940 = vmatprep.subr.bf16.mxu0 %v821
        %941 = vmatpush2.bf16.msra.mxu0 %v820
        %942 = vmatprep.subr.bf16.mxu0 %v817
        %943 = vmatpush2.bf16.msra.mxu0 %v816
        %944 = vmatprep.mubr.bf16.mxu0 %v491
        %945 = vmatmul.mubr.bf16.gmra.mxu0 %v490
        %v946 = vpop.f32.mrf.mxu0
        %v947 = vadd.f32 %v575, %v946
        %v948 = vpop.f32.mrf.mxu0
        %v949 = vadd.f32 %v579, %v948
        %v950 = vpop.f32.mrf.mxu0
        %v951 = vadd.f32 %v575, %v950
        %v952 = vpop.f32.mrf.mxu0
        %v953 = vadd.f32 %v579, %v952
        %954 = vmatprep.mubr.bf16.mxu0 %v493
        %955 = vmatmul.mubr.bf16.gmra.mxu0 %v492
        %v956 = vpop.f32.mrf.mxu0
        %v957 = vadd.f32 %v575, %v956
        %v958 = vpop.f32.mrf.mxu0
        %v959 = vadd.f32 %v579, %v958
        %v960 = vpop.f32.mrf.mxu0
        %v961 = vadd.f32 %v575, %v960
        %v962 = vpop.f32.mrf.mxu0
        %v963 = vadd.f32 %v579, %v962
        %964 = vmatprep.mubr.bf16.mxu0 %v495
        %965 = vmatmul.mubr.bf16.gmra.mxu0 %v494
        %v966 = vpop.f32.mrf.mxu0
        %v967 = vadd.f32 %v575, %v966
        %v968 = vpop.f32.mrf.mxu0
        %v969 = vadd.f32 %v579, %v968
        %v970 = vpop.f32.mrf.mxu0
        %v971 = vadd.f32 %v575, %v970
        %v972 = vpop.f32.mrf.mxu0
        %v973 = vadd.f32 %v579, %v972
        %974 = vmatprep.mubr.bf16.mxu0 %v497
        %975 = vmatmul.mubr.bf16.gmra.mxu0 %v496
        %v976 = vpop.f32.mrf.mxu0
        %v977 = vadd.f32 %v575, %v976
        %v978 = vpop.f32.mrf.mxu0
        %v979 = vadd.f32 %v579, %v978
        %v980 = vpop.f32.mrf.mxu0
        %v981 = vadd.f32 %v575, %v980
        %v982 = vpop.f32.mrf.mxu0
        %v983 = vadd.f32 %v579, %v982
        %984 = vmatprep.mubr.bf16.mxu0 %v499
        %985 = vmatmul.mubr.bf16.gmra.mxu0 %v498
        %v986 = vpop.f32.mrf.mxu0
        %v987 = vadd.f32 %v575, %v986
        %v988 = vpop.f32.mrf.mxu0
        %v989 = vadd.f32 %v579, %v988
        %v990 = vpop.f32.mrf.mxu0
        %v991 = vadd.f32 %v575, %v990
        %v992 = vpop.f32.mrf.mxu0
        %v993 = vadd.f32 %v579, %v992
        %994 = vmatprep.mubr.bf16.mxu0 %v501
        %995 = vmatmul.mubr.bf16.gmra.mxu0 %v500
        %v996 = vpop.f32.mrf.mxu0
        %v997 = vadd.f32 %v575, %v996
        %v998 = vpop.f32.mrf.mxu0
        %v999 = vadd.f32 %v579, %v998
        %v1000 = vpop.f32.mrf.mxu0
        %v1001 = vadd.f32 %v575, %v1000
        %v1002 = vpop.f32.mrf.mxu0
        %v1003 = vadd.f32 %v579, %v1002
        %1004 = vmatprep.mubr.bf16.mxu0 %v503
        %1005 = vmatmul.mubr.bf16.gmra.mxu0 %v502
        %v1006 = vpop.f32.mrf.mxu0
        %v1007 = vadd.f32 %v575, %v1006
        %v1008 = vpop.f32.mrf.mxu0
        %v1009 = vadd.f32 %v579, %v1008
        %v1010 = vpop.f32.mrf.mxu0
        %v1011 = vadd.f32 %v575, %v1010
        %v1012 = vpop.f32.mrf.mxu0
        %v1013 = vadd.f32 %v579, %v1012
        %1014 = vmatprep.mubr.bf16.mxu0 %v505
        %1015 = vmatmul.mubr.bf16.gmra.mxu0 %v504
        %v1016 = vpop.f32.mrf.mxu0
        %v1017 = vadd.f32 %v575, %v1016
        %v1018 = vpop.f32.mrf.mxu0
        %v1019 = vadd.f32 %v579, %v1018
        %v1020 = vpop.f32.mrf.mxu0
        %v1021 = vadd.f32 %v575, %v1020
        %v1022 = vpop.f32.mrf.mxu0
        %v1023 = vadd.f32 %v579, %v1022
        %1024 = vdwg.mxu0
        %1025 = vmatprep.subr.bf16.mxu0 %v815
        %1026 = vmatpush1.bf16.msra.mxu0 %v814
        %1027 = vmatprep.subr.bf16.mxu0 %v811
        %1028 = vmatpush1.bf16.msra.mxu0 %v810
        %1029 = vmatprep.subr.bf16.mxu0 %v807
        %1030 = vmatpush1.bf16.msra.mxu0 %v806
        %1031 = vmatprep.subr.bf16.mxu0 %v803
        %1032 = vmatpush1.bf16.msra.mxu0 %v802
        %1033 = vmatprep.subr.bf16.mxu0 %v799
        %1034 = vmatpush1.bf16.msra.mxu0 %v798
        %1035 = vmatprep.subr.bf16.mxu0 %v795
        %1036 = vmatpush1.bf16.msra.mxu0 %v794
        %1037 = vmatprep.subr.bf16.mxu0 %v791
        %1038 = vmatpush1.bf16.msra.mxu0 %v790
        %1039 = vmatprep.subr.bf16.mxu0 %v787
        %1040 = vmatpush1.bf16.msra.mxu0 %v786
        %1041 = vmatprep.subr.bf16.mxu0 %v847
        %1042 = vmatpush2.bf16.msra.mxu0 %v846
        %1043 = vmatprep.subr.bf16.mxu0 %v843
        %1044 = vmatpush2.bf16.msra.mxu0 %v842
        %1045 = vmatprep.subr.bf16.mxu0 %v839
        %1046 = vmatpush2.bf16.msra.mxu0 %v838
        %1047 = vmatprep.subr.bf16.mxu0 %v835
        %1048 = vmatpush2.bf16.msra.mxu0 %v834
        %1049 = vmatprep.subr.bf16.mxu0 %v831
        %1050 = vmatpush2.bf16.msra.mxu0 %v830
        %1051 = vmatprep.subr.bf16.mxu0 %v827
        %1052 = vmatpush2.bf16.msra.mxu0 %v826
        %1053 = vmatprep.subr.bf16.mxu0 %v823
        %1054 = vmatpush2.bf16.msra.mxu0 %v822
        %1055 = vmatprep.subr.bf16.mxu0 %v819
        %1056 = vmatpush2.bf16.msra.mxu0 %v818
        %1057 = vmatprep.mubr.bf16.mxu0 %v491
        %1058 = vmatmul.mubr.bf16.gmra.mxu0 %v490
        %v1059 = vpop.f32.mrf.mxu0
        %v1060 = vadd.f32 %v583, %v1059
        %v1061 = vpop.f32.mrf.mxu0
        %v1062 = vadd.f32 %v587, %v1061
        %v1063 = vpop.f32.mrf.mxu0
        %v1064 = vadd.f32 %v583, %v1063
        %v1065 = vpop.f32.mrf.mxu0
        %v1066 = vadd.f32 %v587, %v1065
        %1067 = vmatprep.mubr.bf16.mxu0 %v493
        %1068 = vmatmul.mubr.bf16.gmra.mxu0 %v492
        %v1069 = vpop.f32.mrf.mxu0
        %v1070 = vadd.f32 %v583, %v1069
        %v1071 = vpop.f32.mrf.mxu0
        %v1072 = vadd.f32 %v587, %v1071
        %v1073 = vpop.f32.mrf.mxu0
        %v1074 = vadd.f32 %v583, %v1073
        %v1075 = vpop.f32.mrf.mxu0
        %v1076 = vadd.f32 %v587, %v1075
        %1077 = vmatprep.mubr.bf16.mxu0 %v495
        %1078 = vmatmul.mubr.bf16.gmra.mxu0 %v494
        %v1079 = vpop.f32.mrf.mxu0
        %v1080 = vadd.f32 %v583, %v1079
        %v1081 = vpop.f32.mrf.mxu0
        %v1082 = vadd.f32 %v587, %v1081
        %v1083 = vpop.f32.mrf.mxu0
        %v1084 = vadd.f32 %v583, %v1083
        %v1085 = vpop.f32.mrf.mxu0
        %v1086 = vadd.f32 %v587, %v1085
        %1087 = vmatprep.mubr.bf16.mxu0 %v497
        %1088 = vmatmul.mubr.bf16.gmra.mxu0 %v496
        %v1089 = vpop.f32.mrf.mxu0
        %v1090 = vadd.f32 %v583, %v1089
        %v1091 = vpop.f32.mrf.mxu0
        %v1092 = vadd.f32 %v587, %v1091
        %v1093 = vpop.f32.mrf.mxu0
        %v1094 = vadd.f32 %v583, %v1093
        %v1095 = vpop.f32.mrf.mxu0
        %v1096 = vadd.f32 %v587, %v1095
        %1097 = vmatprep.mubr.bf16.mxu0 %v499
        %1098 = vmatmul.mubr.bf16.gmra.mxu0 %v498
        %v1099 = vpop.f32.mrf.mxu0
        %v1100 = vadd.f32 %v583, %v1099
        %v1101 = vpop.f32.mrf.mxu0
        %v1102 = vadd.f32 %v587, %v1101
        %v1103 = vpop.f32.mrf.mxu0
        %v1104 = vadd.f32 %v583, %v1103
        %v1105 = vpop.f32.mrf.mxu0
        %v1106 = vadd.f32 %v587, %v1105
        %1107 = vmatprep.mubr.bf16.mxu0 %v501
        %1108 = vmatmul.mubr.bf16.gmra.mxu0 %v500
        %v1109 = vpop.f32.mrf.mxu0
        %v1110 = vadd.f32 %v583, %v1109
        %v1111 = vpop.f32.mrf.mxu0
        %v1112 = vadd.f32 %v587, %v1111
        %v1113 = vpop.f32.mrf.mxu0
        %v1114 = vadd.f32 %v583, %v1113
        %v1115 = vpop.f32.mrf.mxu0
        %v1116 = vadd.f32 %v587, %v1115
        %1117 = vmatprep.mubr.bf16.mxu0 %v503
        %1118 = vmatmul.mubr.bf16.gmra.mxu0 %v502
        %v1119 = vpop.f32.mrf.mxu0
        %v1120 = vadd.f32 %v583, %v1119
        %v1121 = vpop.f32.mrf.mxu0
        %v1122 = vadd.f32 %v587, %v1121
        %v1123 = vpop.f32.mrf.mxu0
        %v1124 = vadd.f32 %v583, %v1123
        %v1125 = vpop.f32.mrf.mxu0
        %v1126 = vadd.f32 %v587, %v1125
        %1127 = vmatprep.mubr.bf16.mxu0 %v505
        %1128 = vmatmul.mubr.bf16.gmra.mxu0 %v504
        %v1129 = vpop.f32.mrf.mxu0
        %v1130 = vadd.f32 %v583, %v1129
        %v1131 = vpop.f32.mrf.mxu0
        %v1132 = vadd.f32 %v587, %v1131
        %v1133 = vpop.f32.mrf.mxu0
        %v1134 = vadd.f32 %v583, %v1133
        %v1135 = vpop.f32.mrf.mxu0
        %v1136 = vadd.f32 %v587, %v1135
        %1137 = vdwg.mxu0
        %v1138 = vmax.f32 %v947, 0.0
        %v1139 = vmax.f32 %v949, 0.0
        %v1140 = vmax.f32 %v1060, 0.0
        %v1141 = vmax.f32 %v1062, 0.0
        %v1142 = vmax.f32 %v951, 0.0
        %v1143 = vmax.f32 %v953, 0.0
        %v1144 = vmax.f32 %v1064, 0.0
        %v1145 = vmax.f32 %v1066, 0.0
        %v1146 = vmax.f32 %v957, 0.0
        %v1147 = vmax.f32 %v959, 0.0
        %v1148 = vmax.f32 %v1070, 0.0
        %v1149 = vmax.f32 %v1072, 0.0
        %v1150 = vmax.f32 %v961, 0.0
        %v1151 = vmax.f32 %v963, 0.0
        %v1152 = vmax.f32 %v1074, 0.0
        %v1153 = vmax.f32 %v1076, 0.0
        %v1154 = vmax.f32 %v967, 0.0
        %v1155 = vmax.f32 %v969, 0.0
        %v1156 = vmax.f32 %v1080, 0.0
        %v1157 = vmax.f32 %v1082, 0.0
        %v1158 = vmax.f32 %v971, 0.0
        %v1159 = vmax.f32 %v973, 0.0
        %v1160 = vmax.f32 %v1084, 0.0
        %v1161 = vmax.f32 %v1086, 0.0
        %v1162 = vmax.f32 %v977, 0.0
        %v1163 = vmax.f32 %v979, 0.0
        %v1164 = vmax.f32 %v1090, 0.0
        %v1165 = vmax.f32 %v1092, 0.0
        %v1166 = vmax.f32 %v981, 0.0
        %v1167 = vmax.f32 %v983, 0.0
        %v1168 = vmax.f32 %v1094, 0.0
        %v1169 = vmax.f32 %v1096, 0.0
        %v1170 = vmax.f32 %v987, 0.0
        %v1171 = vmax.f32 %v989, 0.0
        %v1172 = vmax.f32 %v1100, 0.0
        %v1173 = vmax.f32 %v1102, 0.0
        %v1174 = vmax.f32 %v991, 0.0
        %v1175 = vmax.f32 %v993, 0.0
        %v1176 = vmax.f32 %v1104, 0.0
        %v1177 = vmax.f32 %v1106, 0.0
        %v1178 = vmax.f32 %v997, 0.0
        %v1179 = vmax.f32 %v999, 0.0
        %v1180 = vmax.f32 %v1110, 0.0
        %v1181 = vmax.f32 %v1112, 0.0
        %v1182 = vmax.f32 %v1001, 0.0
        %v1183 = vmax.f32 %v1003, 0.0
        %v1184 = vmax.f32 %v1114, 0.0
        %v1185 = vmax.f32 %v1116, 0.0
        %v1186 = vmax.f32 %v1007, 0.0
        %v1187 = vmax.f32 %v1009, 0.0
        %v1188 = vmax.f32 %v1120, 0.0
        %v1189 = vmax.f32 %v1122, 0.0
        %v1190 = vmax.f32 %v1011, 0.0
        %v1191 = vmax.f32 %v1013, 0.0
        %v1192 = vmax.f32 %v1124, 0.0
        %v1193 = vmax.f32 %v1126, 0.0
        %v1194 = vmax.f32 %v1017, 0.0
        %v1195 = vmax.f32 %v1019, 0.0
        %v1196 = vmax.f32 %v1130, 0.0
        %v1197 = vmax.f32 %v1132, 0.0
        %v1198 = vmax.f32 %v1021, 0.0
        %v1199 = vmax.f32 %v1023, 0.0
        %v1200 = vmax.f32 %v1134, 0.0
        %v1201 = vmax.f32 %v1136, 0.0
        %v1202 = vsel %vm442, 1, 0
        %v1203 = vsel %vm443, 1, 0
        %v1204 = vsel %vm444, 1, 0
        %v1205 = vsel %vm445, 1, 0
        %v1206 = vsel %vm446, 1, 0
        %v1207 = vsel %vm447, 1, 0
        %v1208 = vsel %vm448, 1, 0
        %v1209 = vsel %vm449, 1, 0
        %v1210 = vsel %vm450, 1, 0
        %v1211 = vsel %vm451, 1, 0
        %v1212 = vsel %vm452, 1, 0
        %v1213 = vsel %vm453, 1, 0
        %v1214 = vsel %vm454, 1, 0
        %v1215 = vsel %vm455, 1, 0
        %v1216 = vsel %vm456, 1, 0
        %v1217 = vsel %vm457, 1, 0
        %vm1218 = vcmp.eq.s32.totalorder %v1202, 1
        %vm1219 = vcmp.eq.s32.totalorder %v1203, 1
        %vm1220 = vcmp.eq.s32.totalorder %v1204, 1
        %vm1221 = vcmp.eq.s32.totalorder %v1205, 1
        %vm1222 = vcmp.eq.s32.totalorder %v1206, 1
        %vm1223 = vcmp.eq.s32.totalorder %v1207, 1
        %vm1224 = vcmp.eq.s32.totalorder %v1208, 1
        %vm1225 = vcmp.eq.s32.totalorder %v1209, 1
        %vm1226 = vcmp.eq.s32.totalorder %v1210, 1
        %vm1227 = vcmp.eq.s32.totalorder %v1211, 1
        %vm1228 = vcmp.eq.s32.totalorder %v1212, 1
        %vm1229 = vcmp.eq.s32.totalorder %v1213, 1
        %vm1230 = vcmp.eq.s32.totalorder %v1214, 1
        %vm1231 = vcmp.eq.s32.totalorder %v1215, 1
        %vm1232 = vcmp.eq.s32.totalorder %v1216, 1
        %vm1233 = vcmp.eq.s32.totalorder %v1217, 1
        %v1234 = vsel %vm1218, %v1138, 0.0
        %v1235 = vsel %vm1218, %v1139, 0.0
        %v1236 = vsel %vm1218, %v1140, 0.0
        %v1237 = vsel %vm1218, %v1141, 0.0
        %v1238 = vsel %vm1219, %v1142, 0.0
        %v1239 = vsel %vm1219, %v1143, 0.0
        %v1240 = vsel %vm1219, %v1144, 0.0
        %v1241 = vsel %vm1219, %v1145, 0.0
        %v1242 = vsel %vm1220, %v1146, 0.0
        %v1243 = vsel %vm1220, %v1147, 0.0
        %v1244 = vsel %vm1220, %v1148, 0.0
        %v1245 = vsel %vm1220, %v1149, 0.0
        %v1246 = vsel %vm1221, %v1150, 0.0
        %v1247 = vsel %vm1221, %v1151, 0.0
        %v1248 = vsel %vm1221, %v1152, 0.0
        %v1249 = vsel %vm1221, %v1153, 0.0
        %v1250 = vsel %vm1222, %v1154, 0.0
        %v1251 = vsel %vm1222, %v1155, 0.0
        %v1252 = vsel %vm1222, %v1156, 0.0
        %v1253 = vsel %vm1222, %v1157, 0.0
        %v1254 = vsel %vm1223, %v1158, 0.0
        %v1255 = vsel %vm1223, %v1159, 0.0
        %v1256 = vsel %vm1223, %v1160, 0.0
        %v1257 = vsel %vm1223, %v1161, 0.0
        %v1258 = vsel %vm1224, %v1162, 0.0
        %v1259 = vsel %vm1224, %v1163, 0.0
        %v1260 = vsel %vm1224, %v1164, 0.0
        %v1261 = vsel %vm1224, %v1165, 0.0
        %v1262 = vsel %vm1225, %v1166, 0.0
        %v1263 = vsel %vm1225, %v1167, 0.0
        %v1264 = vsel %vm1225, %v1168, 0.0
        %v1265 = vsel %vm1225, %v1169, 0.0
        %v1266 = vsel %vm1226, %v1170, 0.0
        %v1267 = vsel %vm1226, %v1171, 0.0
        %v1268 = vsel %vm1226, %v1172, 0.0
        %v1269 = vsel %vm1226, %v1173, 0.0
        %v1270 = vsel %vm1227, %v1174, 0.0
        %v1271 = vsel %vm1227, %v1175, 0.0
        %v1272 = vsel %vm1227, %v1176, 0.0
        %v1273 = vsel %vm1227, %v1177, 0.0
        %v1274 = vsel %vm1228, %v1178, 0.0
        %v1275 = vsel %vm1228, %v1179, 0.0
        %v1276 = vsel %vm1228, %v1180, 0.0
        %v1277 = vsel %vm1228, %v1181, 0.0
        %v1278 = vsel %vm1229, %v1182, 0.0
        %v1279 = vsel %vm1229, %v1183, 0.0
        %v1280 = vsel %vm1229, %v1184, 0.0
        %v1281 = vsel %vm1229, %v1185, 0.0
        %v1282 = vsel %vm1230, %v1186, 0.0
        %v1283 = vsel %vm1230, %v1187, 0.0
        %v1284 = vsel %vm1230, %v1188, 0.0
        %v1285 = vsel %vm1230, %v1189, 0.0
        %v1286 = vsel %vm1231, %v1190, 0.0
        %v1287 = vsel %vm1231, %v1191, 0.0
        %v1288 = vsel %vm1231, %v1192, 0.0
        %v1289 = vsel %vm1231, %v1193, 0.0
        %v1290 = vsel %vm1232, %v1194, 0.0
        %v1291 = vsel %vm1232, %v1195, 0.0
        %v1292 = vsel %vm1232, %v1196, 0.0
        %v1293 = vsel %vm1232, %v1197, 0.0
        %v1294 = vsel %vm1233, %v1198, 0.0
        %v1295 = vsel %vm1233, %v1199, 0.0
        %v1296 = vsel %vm1233, %v1200, 0.0
        %v1297 = vsel %vm1233, %v1201, 0.0
        %v1298 = vpack.c.bf16 %v1238, %v1234
        %v1299 = vpack.c.bf16 %v1239, %v1235
        %v1300 = vpack.c.bf16 %v1240, %v1236
        %v1301 = vpack.c.bf16 %v1241, %v1237
        %v1302 = vpack.c.bf16 %v1246, %v1242
        %v1303 = vpack.c.bf16 %v1247, %v1243
        %v1304 = vpack.c.bf16 %v1248, %v1244
        %v1305 = vpack.c.bf16 %v1249, %v1245
        %v1306 = vpack.c.bf16 %v1254, %v1250
        %v1307 = vpack.c.bf16 %v1255, %v1251
        %v1308 = vpack.c.bf16 %v1256, %v1252
        %v1309 = vpack.c.bf16 %v1257, %v1253
        %v1310 = vpack.c.bf16 %v1262, %v1258
        %v1311 = vpack.c.bf16 %v1263, %v1259
        %v1312 = vpack.c.bf16 %v1264, %v1260
        %v1313 = vpack.c.bf16 %v1265, %v1261
        %v1314 = vpack.c.bf16 %v1270, %v1266
        %v1315 = vpack.c.bf16 %v1271, %v1267
        %v1316 = vpack.c.bf16 %v1272, %v1268
        %v1317 = vpack.c.bf16 %v1273, %v1269
        %v1318 = vpack.c.bf16 %v1278, %v1274
        %v1319 = vpack.c.bf16 %v1279, %v1275
        %v1320 = vpack.c.bf16 %v1280, %v1276
        %v1321 = vpack.c.bf16 %v1281, %v1277
        %v1322 = vpack.c.bf16 %v1286, %v1282
        %v1323 = vpack.c.bf16 %v1287, %v1283
        %v1324 = vpack.c.bf16 %v1288, %v1284
        %v1325 = vpack.c.bf16 %v1289, %v1285
        %v1326 = vpack.c.bf16 %v1294, %v1290
        %v1327 = vpack.c.bf16 %v1295, %v1291
        %v1328 = vpack.c.bf16 %v1296, %v1292
        %v1329 = vpack.c.bf16 %v1297, %v1293
        %v1330 = vld [vmem:[#allocation10] sm:$0xf]
        %v1331 = vld [vmem:[#allocation10 + $0x4] sm:$0xf]
        %v1332 = vld [vmem:[#allocation10 + $0x8] sm:$0xf]
        %v1333 = vld [vmem:[#allocation10 + $0xc] sm:$0xf]
        %v1334 = vld [vmem:[#allocation10 + $0x10] sm:$0xf]
        %v1335 = vld [vmem:[#allocation10 + $0x14] sm:$0xf]
        %v1336 = vld [vmem:[#allocation10 + $0x18] sm:$0xf]
        %v1337 = vld [vmem:[#allocation10 + $0x1c] sm:$0xf]
        %v1338 = vld [vmem:[#allocation10 + $0x20] sm:$0xf]
        %v1339 = vld [vmem:[#allocation10 + $0x24] sm:$0xf]
        %v1340 = vld [vmem:[#allocation10 + $0x28] sm:$0xf]
        %v1341 = vld [vmem:[#allocation10 + $0x2c] sm:$0xf]
        %v1342 = vld [vmem:[#allocation10 + $0x30] sm:$0xf]
        %v1343 = vld [vmem:[#allocation10 + $0x34] sm:$0xf]
        %v1344 = vld [vmem:[#allocation10 + $0x38] sm:$0xf]
        %v1345 = vld [vmem:[#allocation10 + $0x3c] sm:$0xf]
        %v1346 = vld [vmem:[#allocation10 + $0x40] sm:$0xf]
        %v1347 = vld [vmem:[#allocation10 + $0x44] sm:$0xf]
        %v1348 = vld [vmem:[#allocation10 + $0x48] sm:$0xf]
        %v1349 = vld [vmem:[#allocation10 + $0x4c] sm:$0xf]
        %v1350 = vld [vmem:[#allocation10 + $0x50] sm:$0xf]
        %v1351 = vld [vmem:[#allocation10 + $0x54] sm:$0xf]
        %v1352 = vld [vmem:[#allocation10 + $0x58] sm:$0xf]
        %v1353 = vld [vmem:[#allocation10 + $0x5c] sm:$0xf]
        %v1354 = vld [vmem:[#allocation10 + $0x60] sm:$0xf]
        %v1355 = vld [vmem:[#allocation10 + $0x64] sm:$0xf]
        %v1356 = vld [vmem:[#allocation10 + $0x68] sm:$0xf]
        %v1357 = vld [vmem:[#allocation10 + $0x6c] sm:$0xf]
        %v1358 = vld [vmem:[#allocation10 + $0x70] sm:$0xf]
        %v1359 = vld [vmem:[#allocation10 + $0x74] sm:$0xf]
        %v1360 = vld [vmem:[#allocation10 + $0x78] sm:$0xf]
        %v1361 = vld [vmem:[#allocation10 + $0x7c] sm:$0xf]
        %v1362 = vld [vmem:[#allocation10 + $0x80] sm:$0xf]
        %v1363 = vld [vmem:[#allocation10 + $0x84] sm:$0xf]
        %v1364 = vld [vmem:[#allocation10 + $0x88] sm:$0xf]
        %v1365 = vld [vmem:[#allocation10 + $0x8c] sm:$0xf]
        %v1366 = vld [vmem:[#allocation10 + $0x90] sm:$0xf]
        %v1367 = vld [vmem:[#allocation10 + $0x94] sm:$0xf]
        %v1368 = vld [vmem:[#allocation10 + $0x98] sm:$0xf]
        %v1369 = vld [vmem:[#allocation10 + $0x9c] sm:$0xf]
        %v1370 = vld [vmem:[#allocation10 + $0xa0] sm:$0xf]
        %v1371 = vld [vmem:[#allocation10 + $0xa4] sm:$0xf]
        %v1372 = vld [vmem:[#allocation10 + $0xa8] sm:$0xf]
        %v1373 = vld [vmem:[#allocation10 + $0xac] sm:$0xf]
        %v1374 = vld [vmem:[#allocation10 + $0xb0] sm:$0xf]
        %v1375 = vld [vmem:[#allocation10 + $0xb4] sm:$0xf]
        %v1376 = vld [vmem:[#allocation10 + $0xb8] sm:$0xf]
        %v1377 = vld [vmem:[#allocation10 + $0xbc] sm:$0xf]
        %v1378 = vld [vmem:[#allocation10 + $0xc0] sm:$0xf]
        %v1379 = vld [vmem:[#allocation10 + $0xc4] sm:$0xf]
        %v1380 = vld [vmem:[#allocation10 + $0xc8] sm:$0xf]
        %v1381 = vld [vmem:[#allocation10 + $0xcc] sm:$0xf]
        %v1382 = vld [vmem:[#allocation10 + $0xd0] sm:$0xf]
        %v1383 = vld [vmem:[#allocation10 + $0xd4] sm:$0xf]
        %v1384 = vld [vmem:[#allocation10 + $0xd8] sm:$0xf]
        %v1385 = vld [vmem:[#allocation10 + $0xdc] sm:$0xf]
        %v1386 = vld [vmem:[#allocation10 + $0xe0] sm:$0xf]
        %v1387 = vld [vmem:[#allocation10 + $0xe4] sm:$0xf]
        %v1388 = vld [vmem:[#allocation10 + $0xe8] sm:$0xf]
        %v1389 = vld [vmem:[#allocation10 + $0xec] sm:$0xf]
        %v1390 = vld [vmem:[#allocation10 + $0xf0] sm:$0xf]
        %v1391 = vld [vmem:[#allocation10 + $0xf4] sm:$0xf]
        %v1392 = vld [vmem:[#allocation10 + $0xf8] sm:$0xf]
        %v1393 = vld [vmem:[#allocation10 + $0xfc] sm:$0xf]
        %v1394 = vld [vmem:[%s4] sm:$0x1]
        %v1396 = vlaneseq
        %v1397 = vshrl.u32 %v1396, 7
        %v1398 = vsub.s32 0, %v1397
        %v1399 = vrot.slane %v1394, %v1398
        %v1465 = vunpack.c.l.b16 %v1330
        %v1466 = vunpack.c.l.b16 %v1331
        %v1467 = vunpack.c.l.b16 %v1332
        %v1468 = vunpack.c.l.b16 %v1333
        %v1469 = vunpack.c.l.b16 %v1334
        %v1470 = vunpack.c.l.b16 %v1335
        %v1471 = vunpack.c.l.b16 %v1336
        %v1472 = vunpack.c.l.b16 %v1337
        %v1473 = vunpack.c.l.b16 %v1338
        %v1474 = vunpack.c.l.b16 %v1339
        %v1475 = vunpack.c.l.b16 %v1340
        %v1476 = vunpack.c.l.b16 %v1341
        %v1477 = vunpack.c.l.b16 %v1342
        %v1478 = vunpack.c.l.b16 %v1343
        %v1479 = vunpack.c.l.b16 %v1344
        %v1480 = vunpack.c.l.b16 %v1345
        %v1481 = vunpack.c.l.b16 %v1346
        %v1482 = vunpack.c.l.b16 %v1347
        %v1483 = vunpack.c.l.b16 %v1348
        %v1484 = vunpack.c.l.b16 %v1349
        %v1485 = vunpack.c.l.b16 %v1350
        %v1486 = vunpack.c.l.b16 %v1351
        %v1487 = vunpack.c.l.b16 %v1352
        %v1488 = vunpack.c.l.b16 %v1353
        %v1489 = vunpack.c.l.b16 %v1354
        %v1490 = vunpack.c.l.b16 %v1355
        %v1491 = vunpack.c.l.b16 %v1356
        %v1492 = vunpack.c.l.b16 %v1357
        %v1493 = vunpack.c.l.b16 %v1358
        %v1494 = vunpack.c.l.b16 %v1359
        %v1495 = vunpack.c.l.b16 %v1360
        %v1496 = vunpack.c.l.b16 %v1361
        %v1497 = vunpack.c.l.b16 %v1362
        %v1498 = vunpack.c.l.b16 %v1363
        %v1499 = vunpack.c.l.b16 %v1364
        %v1500 = vunpack.c.l.b16 %v1365
        %v1501 = vunpack.c.l.b16 %v1366
        %v1502 = vunpack.c.l.b16 %v1367
        %v1503 = vunpack.c.l.b16 %v1368
        %v1504 = vunpack.c.l.b16 %v1369
        %v1505 = vunpack.c.l.b16 %v1370
        %v1506 = vunpack.c.l.b16 %v1371
        %v1507 = vunpack.c.l.b16 %v1372
        %v1508 = vunpack.c.l.b16 %v1373
        %v1509 = vunpack.c.l.b16 %v1374
        %v1510 = vunpack.c.l.b16 %v1375
        %v1511 = vunpack.c.l.b16 %v1376
        %v1512 = vunpack.c.l.b16 %v1377
        %v1513 = vunpack.c.l.b16 %v1378
        %v1514 = vunpack.c.l.b16 %v1379
        %v1515 = vunpack.c.l.b16 %v1380
        %v1516 = vunpack.c.l.b16 %v1381
        %v1517 = vunpack.c.l.b16 %v1382
        %v1518 = vunpack.c.l.b16 %v1383
        %v1519 = vunpack.c.l.b16 %v1384
        %v1520 = vunpack.c.l.b16 %v1385
        %v1521 = vunpack.c.l.b16 %v1386
        %v1522 = vunpack.c.l.b16 %v1387
        %v1523 = vunpack.c.l.b16 %v1388
        %v1524 = vunpack.c.l.b16 %v1389
        %v1525 = vunpack.c.l.b16 %v1390
        %v1526 = vunpack.c.l.b16 %v1391
        %v1527 = vunpack.c.l.b16 %v1392
        %v1528 = vunpack.c.l.b16 %v1393
        %v1529 = vpack.c.b16 %v1466, %v1465
        %v1530 = vpack.c.b16 %v1468, %v1467
        %v1531 = vpack.c.b16 %v1470, %v1469
        %v1532 = vpack.c.b16 %v1472, %v1471
        %v1533 = vpack.c.b16 %v1474, %v1473
        %v1534 = vpack.c.b16 %v1476, %v1475
        %v1535 = vpack.c.b16 %v1478, %v1477
        %v1536 = vpack.c.b16 %v1480, %v1479
        %v1537 = vpack.c.b16 %v1482, %v1481
        %v1538 = vpack.c.b16 %v1484, %v1483
        %v1539 = vpack.c.b16 %v1486, %v1485
        %v1540 = vpack.c.b16 %v1488, %v1487
        %v1541 = vpack.c.b16 %v1490, %v1489
        %v1542 = vpack.c.b16 %v1492, %v1491
        %v1543 = vpack.c.b16 %v1494, %v1493
        %v1544 = vpack.c.b16 %v1496, %v1495
        %v1545 = vpack.c.b16 %v1498, %v1497
        %v1546 = vpack.c.b16 %v1500, %v1499
        %v1547 = vpack.c.b16 %v1502, %v1501
        %v1548 = vpack.c.b16 %v1504, %v1503
        %v1549 = vpack.c.b16 %v1506, %v1505
        %v1550 = vpack.c.b16 %v1508, %v1507
        %v1551 = vpack.c.b16 %v1510, %v1509
        %v1552 = vpack.c.b16 %v1512, %v1511
        %v1553 = vpack.c.b16 %v1514, %v1513
        %v1554 = vpack.c.b16 %v1516, %v1515
        %v1555 = vpack.c.b16 %v1518, %v1517
        %v1556 = vpack.c.b16 %v1520, %v1519
        %v1557 = vpack.c.b16 %v1522, %v1521
        %v1558 = vpack.c.b16 %v1524, %v1523
        %v1559 = vpack.c.b16 %v1526, %v1525
        %v1560 = vpack.c.b16 %v1528, %v1527
        %1593 = vmatprep.subr.bf16.mxu0 0
        %1594 = vmatpush1.bf16.msra.mxu0 %v1536
        %1595 = vmatprep.subr.bf16.mxu0 0
        %1596 = vmatpush1.bf16.msra.mxu0 %v1535
        %1597 = vmatprep.subr.bf16.mxu0 0
        %1598 = vmatpush1.bf16.msra.mxu0 %v1534
        %1599 = vmatprep.subr.bf16.mxu0 0
        %1600 = vmatpush1.bf16.msra.mxu0 %v1533
        %1601 = vmatprep.subr.bf16.mxu0 0
        %1602 = vmatpush1.bf16.msra.mxu0 %v1532
        %1603 = vmatprep.subr.bf16.mxu0 0
        %1604 = vmatpush1.bf16.msra.mxu0 %v1531
        %1605 = vmatprep.subr.bf16.mxu0 0
        %1606 = vmatpush1.bf16.msra.mxu0 %v1530
        %1607 = vmatprep.subr.bf16.mxu0 0
        %1608 = vmatpush1.bf16.msra.mxu0 %v1529
        %1609 = vmatprep.subr.bf16.mxu0 0
        %1610 = vmatpush2.bf16.msra.mxu0 %v1544
        %1611 = vmatprep.subr.bf16.mxu0 0
        %1612 = vmatpush2.bf16.msra.mxu0 %v1543
        %1613 = vmatprep.subr.bf16.mxu0 0
        %1614 = vmatpush2.bf16.msra.mxu0 %v1542
        %1615 = vmatprep.subr.bf16.mxu0 0
        %1616 = vmatpush2.bf16.msra.mxu0 %v1541
        %1617 = vmatprep.subr.bf16.mxu0 0
        %1618 = vmatpush2.bf16.msra.mxu0 %v1540
        %1619 = vmatprep.subr.bf16.mxu0 0
        %1620 = vmatpush2.bf16.msra.mxu0 %v1539
        %1621 = vmatprep.subr.bf16.mxu0 0
        %1622 = vmatpush2.bf16.msra.mxu0 %v1538
        %1623 = vmatprep.subr.bf16.mxu0 0
        %1624 = vmatpush2.bf16.msra.mxu0 %v1537
        %1625 = vmatprep.mubr.bf16.mxu0 %v1299
        %1626 = vmatmul.mubr.bf16.gmra.mxu0 %v1298
        %v1627 = vpop.f32.mrf.mxu0
        %v1628 = vadd.f32 %v1399, %v1627
        %v1629 = vpop.f32.mrf.mxu0
        %v1630 = vpop.f32.mrf.mxu0
        %v1631 = vadd.f32 %v1399, %v1630
        %v1632 = vpop.f32.mrf.mxu0
        %1633 = vmatprep.mubr.bf16.mxu0 %v1303
        %1634 = vmatmul.mubr.bf16.gmra.mxu0 %v1302
        %v1635 = vpop.f32.mrf.mxu0
        %v1636 = vadd.f32 %v1399, %v1635
        %v1637 = vpop.f32.mrf.mxu0
        %v1638 = vpop.f32.mrf.mxu0
        %v1639 = vadd.f32 %v1399, %v1638
        %v1640 = vpop.f32.mrf.mxu0
        %1641 = vmatprep.mubr.bf16.mxu0 %v1307
        %1642 = vmatmul.mubr.bf16.gmra.mxu0 %v1306
        %v1643 = vpop.f32.mrf.mxu0
        %v1644 = vadd.f32 %v1399, %v1643
        %v1645 = vpop.f32.mrf.mxu0
        %v1646 = vpop.f32.mrf.mxu0
        %v1647 = vadd.f32 %v1399, %v1646
        %v1648 = vpop.f32.mrf.mxu0
        %1649 = vmatprep.mubr.bf16.mxu0 %v1311
        %1650 = vmatmul.mubr.bf16.gmra.mxu0 %v1310
        %v1651 = vpop.f32.mrf.mxu0
        %v1652 = vadd.f32 %v1399, %v1651
        %v1653 = vpop.f32.mrf.mxu0
        %v1654 = vpop.f32.mrf.mxu0
        %v1655 = vadd.f32 %v1399, %v1654
        %v1656 = vpop.f32.mrf.mxu0
        %1657 = vmatprep.mubr.bf16.mxu0 %v1315
        %1658 = vmatmul.mubr.bf16.gmra.mxu0 %v1314
        %v1659 = vpop.f32.mrf.mxu0
        %v1660 = vadd.f32 %v1399, %v1659
        %v1661 = vpop.f32.mrf.mxu0
        %v1662 = vpop.f32.mrf.mxu0
        %v1663 = vadd.f32 %v1399, %v1662
        %v1664 = vpop.f32.mrf.mxu0
        %1665 = vmatprep.mubr.bf16.mxu0 %v1319
        %1666 = vmatmul.mubr.bf16.gmra.mxu0 %v1318
        %v1667 = vpop.f32.mrf.mxu0
        %v1668 = vadd.f32 %v1399, %v1667
        %v1669 = vpop.f32.mrf.mxu0
        %v1670 = vpop.f32.mrf.mxu0
        %v1671 = vadd.f32 %v1399, %v1670
        %v1672 = vpop.f32.mrf.mxu0
        %1673 = vmatprep.mubr.bf16.mxu0 %v1323
        %1674 = vmatmul.mubr.bf16.gmra.mxu0 %v1322
        %v1675 = vpop.f32.mrf.mxu0
        %v1676 = vadd.f32 %v1399, %v1675
        %v1677 = vpop.f32.mrf.mxu0
        %v1678 = vpop.f32.mrf.mxu0
        %v1679 = vadd.f32 %v1399, %v1678
        %v1680 = vpop.f32.mrf.mxu0
        %1681 = vmatprep.mubr.bf16.mxu0 %v1327
        %1682 = vmatmul.mubr.bf16.gmra.mxu0 %v1326
        %v1683 = vpop.f32.mrf.mxu0
        %v1684 = vadd.f32 %v1399, %v1683
        %v1685 = vpop.f32.mrf.mxu0
        %v1686 = vpop.f32.mrf.mxu0
        %v1687 = vadd.f32 %v1399, %v1686
        %v1688 = vpop.f32.mrf.mxu0
        %1689 = vdwg.mxu0
        %1690 = vmatprep.subr.bf16.mxu0 0
        %1691 = vmatpush1.bf16.msra.mxu0 %v1552
        %1692 = vmatprep.subr.bf16.mxu0 0
        %1693 = vmatpush1.bf16.msra.mxu0 %v1551
        %1694 = vmatprep.subr.bf16.mxu0 0
        %1695 = vmatpush1.bf16.msra.mxu0 %v1550
        %1696 = vmatprep.subr.bf16.mxu0 0
        %1697 = vmatpush1.bf16.msra.mxu0 %v1549
        %1698 = vmatprep.subr.bf16.mxu0 0
        %1699 = vmatpush1.bf16.msra.mxu0 %v1548
        %1700 = vmatprep.subr.bf16.mxu0 0
        %1701 = vmatpush1.bf16.msra.mxu0 %v1547
        %1702 = vmatprep.subr.bf16.mxu0 0
        %1703 = vmatpush1.bf16.msra.mxu0 %v1546
        %1704 = vmatprep.subr.bf16.mxu0 0
        %1705 = vmatpush1.bf16.msra.mxu0 %v1545
        %1706 = vmatprep.subr.bf16.mxu0 0
        %1707 = vmatpush2.bf16.msra.mxu0 %v1560
        %1708 = vmatprep.subr.bf16.mxu0 0
        %1709 = vmatpush2.bf16.msra.mxu0 %v1559
        %1710 = vmatprep.subr.bf16.mxu0 0
        %1711 = vmatpush2.bf16.msra.mxu0 %v1558
        %1712 = vmatprep.subr.bf16.mxu0 0
        %1713 = vmatpush2.bf16.msra.mxu0 %v1557
        %1714 = vmatprep.subr.bf16.mxu0 0
        %1715 = vmatpush2.bf16.msra.mxu0 %v1556
        %1716 = vmatprep.subr.bf16.mxu0 0
        %1717 = vmatpush2.bf16.msra.mxu0 %v1555
        %1718 = vmatprep.subr.bf16.mxu0 0
        %1719 = vmatpush2.bf16.msra.mxu0 %v1554
        %1720 = vmatprep.subr.bf16.mxu0 0
        %1721 = vmatpush2.bf16.msra.mxu0 %v1553
        %1722 = vmatprep.mubr.bf16.mxu0 %v1301
        %1723 = vmatmul.mubr.bf16.gmra.mxu0 %v1300
        %v1724 = vpop.f32.mrf.mxu0
        %v1725 = vadd.f32 %v1628, %v1724
        %v1726 = vpop.f32.mrf.mxu0
        %v1727 = vpop.f32.mrf.mxu0
        %v1728 = vadd.f32 %v1631, %v1727
        %v1729 = vpop.f32.mrf.mxu0
        %1730 = vmatprep.mubr.bf16.mxu0 %v1305
        %1731 = vmatmul.mubr.bf16.gmra.mxu0 %v1304
        %v1732 = vpop.f32.mrf.mxu0
        %v1733 = vadd.f32 %v1636, %v1732
        %v1734 = vpop.f32.mrf.mxu0
        %v1735 = vpop.f32.mrf.mxu0
        %v1736 = vadd.f32 %v1639, %v1735
        %v1737 = vpop.f32.mrf.mxu0
        %1738 = vmatprep.mubr.bf16.mxu0 %v1309
        %1739 = vmatmul.mubr.bf16.gmra.mxu0 %v1308
        %v1740 = vpop.f32.mrf.mxu0
        %v1741 = vadd.f32 %v1644, %v1740
        %v1742 = vpop.f32.mrf.mxu0
        %v1743 = vpop.f32.mrf.mxu0
        %v1744 = vadd.f32 %v1647, %v1743
        %v1745 = vpop.f32.mrf.mxu0
        %1746 = vmatprep.mubr.bf16.mxu0 %v1313
        %1747 = vmatmul.mubr.bf16.gmra.mxu0 %v1312
        %v1748 = vpop.f32.mrf.mxu0
        %v1749 = vadd.f32 %v1652, %v1748
        %v1750 = vpop.f32.mrf.mxu0
        %v1751 = vpop.f32.mrf.mxu0
        %v1752 = vadd.f32 %v1655, %v1751
        %v1753 = vpop.f32.mrf.mxu0
        %1754 = vmatprep.mubr.bf16.mxu0 %v1317
        %1755 = vmatmul.mubr.bf16.gmra.mxu0 %v1316
        %v1756 = vpop.f32.mrf.mxu0
        %v1757 = vadd.f32 %v1660, %v1756
        %v1758 = vpop.f32.mrf.mxu0
        %v1759 = vpop.f32.mrf.mxu0
        %v1760 = vadd.f32 %v1663, %v1759
        %v1761 = vpop.f32.mrf.mxu0
        %1762 = vmatprep.mubr.bf16.mxu0 %v1321
        %1763 = vmatmul.mubr.bf16.gmra.mxu0 %v1320
        %v1764 = vpop.f32.mrf.mxu0
        %v1765 = vadd.f32 %v1668, %v1764
        %v1766 = vpop.f32.mrf.mxu0
        %v1767 = vpop.f32.mrf.mxu0
        %v1768 = vadd.f32 %v1671, %v1767
        %v1769 = vpop.f32.mrf.mxu0
        %1770 = vmatprep.mubr.bf16.mxu0 %v1325
        %1771 = vmatmul.mubr.bf16.gmra.mxu0 %v1324
        %v1772 = vpop.f32.mrf.mxu0
        %v1773 = vadd.f32 %v1676, %v1772
        %v1774 = vpop.f32.mrf.mxu0
        %v1775 = vpop.f32.mrf.mxu0
        %v1776 = vadd.f32 %v1679, %v1775
        %v1777 = vpop.f32.mrf.mxu0
        %1778 = vmatprep.mubr.bf16.mxu0 %v1329
        %1779 = vmatmul.mubr.bf16.gmra.mxu0 %v1328
        %v1780 = vpop.f32.mrf.mxu0
        %v1781 = vadd.f32 %v1684, %v1780
        %v1782 = vpop.f32.mrf.mxu0
        %v1783 = vpop.f32.mrf.mxu0
        %v1784 = vadd.f32 %v1687, %v1783
        %v1785 = vpop.f32.mrf.mxu0
        %1786 = vdwg.mxu0
        %v1787 = vtanh.pop %v1725
        %v1788 = vtanh.pop %v1728
        %v1789 = vtanh.pop %v1733
        %v1790 = vtanh.pop %v1736
        %v1791 = vtanh.pop %v1741
        %v1792 = vtanh.pop %v1744
        %v1793 = vtanh.pop %v1749
        %v1794 = vtanh.pop %v1752
        %v1795 = vtanh.pop %v1757
        %v1796 = vtanh.pop %v1760
        %v1797 = vtanh.pop %v1765
        %v1798 = vtanh.pop %v1768
        %v1799 = vtanh.pop %v1773
        %v1800 = vtanh.pop %v1776
        %v1801 = vtanh.pop %v1781
        %v1802 = vtanh.pop %v1784
        %v1803 = vpack.c.bf16 %v1788, %v1787
        %v1804 = vpack.c.bf16 %v1790, %v1789
        %v1805 = vpack.c.bf16 %v1792, %v1791
        %v1806 = vpack.c.bf16 %v1794, %v1793
        %v1807 = vpack.c.bf16 %v1796, %v1795
        %v1808 = vpack.c.bf16 %v1798, %v1797
        %v1809 = vpack.c.bf16 %v1800, %v1799
        %v1810 = vpack.c.bf16 %v1802, %v1801
        %v1811 = vld [vmem:[%s5] sm:$0xf]
        %v1812 = vld [vmem:[%s5 + $0x4] sm:$0xf]
        %v1813 = vld [vmem:[%s5 + $0x8] sm:$0xf]
        %v1814 = vld [vmem:[%s5 + $0xc] sm:$0xf]
        %v1815 = vld [vmem:[%s5 + $0x10] sm:$0xf]
        %v1816 = vld [vmem:[%s5 + $0x14] sm:$0xf]
        %v1817 = vld [vmem:[%s5 + $0x18] sm:$0xf]
        %v1818 = vld [vmem:[%s5 + $0x1c] sm:$0xf]
        %v1819 = vld [vmem:[%s5 + $0x20] sm:$0xf]
        %v1820 = vld [vmem:[%s5 + $0x24] sm:$0xf]
        %v1821 = vld [vmem:[%s5 + $0x28] sm:$0xf]
        %v1822 = vld [vmem:[%s5 + $0x2c] sm:$0xf]
        %v1823 = vld [vmem:[%s5 + $0x30] sm:$0xf]
        %v1824 = vld [vmem:[%s5 + $0x34] sm:$0xf]
        %v1825 = vld [vmem:[%s5 + $0x38] sm:$0xf]
        %v1826 = vld [vmem:[%s5 + $0x3c] sm:$0xf]
        %v1827 = vld [vmem:[#allocation4] sm:$0x1]
        %v1829 = vlaneseq
        %v1830 = vshrl.u32 %v1829, 7
        %v1831 = vsub.s32 0, %v1830
        %v1832 = vrot.slane %v1827, %v1831
        %v1850 = vunpack.c.l.b16 %v1811
        %v1851 = vunpack.c.l.b16 %v1812
        %v1852 = vunpack.c.l.b16 %v1813
        %v1853 = vunpack.c.l.b16 %v1814
        %v1854 = vunpack.c.l.b16 %v1815
        %v1855 = vunpack.c.l.b16 %v1816
        %v1856 = vunpack.c.l.b16 %v1817
        %v1857 = vunpack.c.l.b16 %v1818
        %v1858 = vunpack.c.l.b16 %v1819
        %v1859 = vunpack.c.l.b16 %v1820
        %v1860 = vunpack.c.l.b16 %v1821
        %v1861 = vunpack.c.l.b16 %v1822
        %v1862 = vunpack.c.l.b16 %v1823
        %v1863 = vunpack.c.l.b16 %v1824
        %v1864 = vunpack.c.l.b16 %v1825
        %v1865 = vunpack.c.l.b16 %v1826
        %v1866 = vpack.c.b16 %v1851, %v1850
        %v1867 = vpack.c.b16 %v1853, %v1852
        %v1868 = vpack.c.b16 %v1855, %v1854
        %v1869 = vpack.c.b16 %v1857, %v1856
        %v1870 = vpack.c.b16 %v1859, %v1858
        %v1871 = vpack.c.b16 %v1861, %v1860
        %v1872 = vpack.c.b16 %v1863, %v1862
        %v1873 = vpack.c.b16 %v1865, %v1864
        %1882 = vmatprep.subr.bf16.mxu0 0
        %1883 = vmatpush1.bf16.msra.mxu0 %v1873
        %1884 = vmatprep.subr.bf16.mxu0 0
        %1885 = vmatpush1.bf16.msra.mxu0 %v1872
        %1886 = vmatprep.subr.bf16.mxu0 0
        %1887 = vmatpush1.bf16.msra.mxu0 %v1871
        %1888 = vmatprep.subr.bf16.mxu0 0
        %1889 = vmatpush1.bf16.msra.mxu0 %v1870
        %1890 = vmatprep.subr.bf16.mxu0 0
        %1891 = vmatpush1.bf16.msra.mxu0 %v1869
        %1892 = vmatprep.subr.bf16.mxu0 0
        %1893 = vmatpush1.bf16.msra.mxu0 %v1868
        %1894 = vmatprep.subr.bf16.mxu0 0
        %1895 = vmatpush1.bf16.msra.mxu0 %v1867
        %1896 = vmatprep.subr.bf16.mxu0 0
        %1897 = vmatpush1.bf16.msra.mxu0 %v1866
        %1898 = vmatprep.subr.bf16.mxu0 0
        %1899 = vmatpush2.bf16.msra.mxu0 0
        %1900 = vmatprep.subr.bf16.mxu0 0
        %1901 = vmatpush2.bf16.msra.mxu0 0
        %1902 = vmatprep.subr.bf16.mxu0 0
        %1903 = vmatpush2.bf16.msra.mxu0 0
        %1904 = vmatprep.subr.bf16.mxu0 0
        %1905 = vmatpush2.bf16.msra.mxu0 0
        %1906 = vmatprep.subr.bf16.mxu0 0
        %1907 = vmatpush2.bf16.msra.mxu0 0
        %1908 = vmatprep.subr.bf16.mxu0 0
        %1909 = vmatpush2.bf16.msra.mxu0 0
        %1910 = vmatprep.subr.bf16.mxu0 0
        %1911 = vmatpush2.bf16.msra.mxu0 0
        %1912 = vmatprep.subr.bf16.mxu0 0
        %1913 = vmatpush2.bf16.msra.mxu0 0
        %1914 = vmatprep.mubr.bf16.mxu0 0
        %1915 = vmatmul.mubr.bf16.gmra.mxu0 %v1803
        %v1916 = vpop.f32.mrf.mxu0
        %v1917 = vadd.f32 %v1832, %v1916
        %v1918 = vpop.f32.mrf.mxu0
        %v1919 = vpop.f32.mrf.mxu0
        %v1920 = vadd.f32 %v1832, %v1919
        %v1921 = vpop.f32.mrf.mxu0
        %1922 = vmatprep.mubr.bf16.mxu0 0
        %1923 = vmatmul.mubr.bf16.gmra.mxu0 %v1804
        %v1924 = vpop.f32.mrf.mxu0
        %v1925 = vadd.f32 %v1832, %v1924
        %v1926 = vpop.f32.mrf.mxu0
        %v1927 = vpop.f32.mrf.mxu0
        %v1928 = vadd.f32 %v1832, %v1927
        %v1929 = vpop.f32.mrf.mxu0
        %1930 = vmatprep.mubr.bf16.mxu0 0
        %1931 = vmatmul.mubr.bf16.gmra.mxu0 %v1805
        %v1932 = vpop.f32.mrf.mxu0
        %v1933 = vadd.f32 %v1832, %v1932
        %v1934 = vpop.f32.mrf.mxu0
        %v1935 = vpop.f32.mrf.mxu0
        %v1936 = vadd.f32 %v1832, %v1935
        %v1937 = vpop.f32.mrf.mxu0
        %1938 = vmatprep.mubr.bf16.mxu0 0
        %1939 = vmatmul.mubr.bf16.gmra.mxu0 %v1806
        %v1940 = vpop.f32.mrf.mxu0
        %v1941 = vadd.f32 %v1832, %v1940
        %v1942 = vpop.f32.mrf.mxu0
        %v1943 = vpop.f32.mrf.mxu0
        %v1944 = vadd.f32 %v1832, %v1943
        %v1945 = vpop.f32.mrf.mxu0
        %1946 = vmatprep.mubr.bf16.mxu0 0
        %1947 = vmatmul.mubr.bf16.gmra.mxu0 %v1807
        %v1948 = vpop.f32.mrf.mxu0
        %v1949 = vadd.f32 %v1832, %v1948
        %v1950 = vpop.f32.mrf.mxu0
        %v1951 = vpop.f32.mrf.mxu0
        %v1952 = vadd.f32 %v1832, %v1951
        %v1953 = vpop.f32.mrf.mxu0
        %1954 = vmatprep.mubr.bf16.mxu0 0
        %1955 = vmatmul.mubr.bf16.gmra.mxu0 %v1808
        %v1956 = vpop.f32.mrf.mxu0
        %v1957 = vadd.f32 %v1832, %v1956
        %v1958 = vpop.f32.mrf.mxu0
        %v1959 = vpop.f32.mrf.mxu0
        %v1960 = vadd.f32 %v1832, %v1959
        %v1961 = vpop.f32.mrf.mxu0
        %1962 = vmatprep.mubr.bf16.mxu0 0
        %1963 = vmatmul.mubr.bf16.gmra.mxu0 %v1809
        %v1964 = vpop.f32.mrf.mxu0
        %v1965 = vadd.f32 %v1832, %v1964
        %v1966 = vpop.f32.mrf.mxu0
        %v1967 = vpop.f32.mrf.mxu0
        %v1968 = vadd.f32 %v1832, %v1967
        %v1969 = vpop.f32.mrf.mxu0
        %1970 = vmatprep.mubr.bf16.mxu0 0
        %1971 = vmatmul.mubr.bf16.gmra.mxu0 %v1810
        %v1972 = vpop.f32.mrf.mxu0
        %v1973 = vadd.f32 %v1832, %v1972
        %v1974 = vpop.f32.mrf.mxu0
        %v1975 = vpop.f32.mrf.mxu0
        %v1976 = vadd.f32 %v1832, %v1975
        %v1977 = vpop.f32.mrf.mxu0
        %1978 = vdwg.mxu0
        %v1979 = vsel %vm442, %v1917, -1e+30
        %v1980 = vsel %vm443, %v1920, -1e+30
        %v1981 = vsel %vm444, %v1925, -1e+30
        %v1982 = vsel %vm445, %v1928, -1e+30
        %v1983 = vsel %vm446, %v1933, -1e+30
        %v1984 = vsel %vm447, %v1936, -1e+30
        %v1985 = vsel %vm448, %v1941, -1e+30
        %v1986 = vsel %vm449, %v1944, -1e+30
        %v1987 = vsel %vm450, %v1949, -1e+30
        %v1988 = vsel %vm451, %v1952, -1e+30
        %v1989 = vsel %vm452, %v1957, -1e+30
        %v1990 = vsel %vm453, %v1960, -1e+30
        %v1991 = vsel %vm454, %v1965, -1e+30
        %v1992 = vsel %vm455, %v1968, -1e+30
        %v1993 = vsel %vm456, %v1973, -1e+30
        %v1994 = vsel %vm457, %v1976, -1e+30
        %v1995 = vld [vmem:[#allocation2] sm:$0x1]
        %vm1996 = vcmask 7168
        %v1997 = vsel %vm1996, %v1979, -inf
        %v1998 = vsel %vm1996, %v1980, -inf
        %v1999 = vsel %vm1996, %v1981, -inf
        %v2000 = vsel %vm1996, %v1982, -inf
        %v2001 = vsel %vm1996, %v1983, -inf
        %v2002 = vmax.f32 %v1997, %v2001
        %v2003 = vsel %vm1996, %v1984, -inf
        %v2004 = vmax.f32 %v1998, %v2003
        %v2005 = vsel %vm1996, %v1985, -inf
        %v2006 = vmax.f32 %v1999, %v2005
        %v2007 = vsel %vm1996, %v1986, -inf
        %v2008 = vmax.f32 %v2000, %v2007
        %v2009 = vsel %vm1996, %v1987, -inf
        %v2010 = vmax.f32 %v2002, %v2009
        %v2011 = vsel %vm1996, %v1988, -inf
        %v2012 = vmax.f32 %v2004, %v2011
        %v2013 = vsel %vm1996, %v1989, -inf
        %v2014 = vmax.f32 %v2006, %v2013
        %v2015 = vsel %vm1996, %v1990, -inf
        %v2016 = vmax.f32 %v2008, %v2015
        %v2017 = vsel %vm1996, %v1991, -inf
        %v2018 = vmax.f32 %v2010, %v2017
        %v2019 = vsel %vm1996, %v1992, -inf
        %v2020 = vmax.f32 %v2012, %v2019
        %v2021 = vsel %vm1996, %v1993, -inf
        %v2022 = vmax.f32 %v2014, %v2021
        %v2023 = vsel %vm1996, %v1994, -inf
        %v2024 = vmax.f32 %v2016, %v2023
        %v2025 = vmax.f32 %v2018, %v2020
        %v2026 = vmax.f32 %v2022, %v2024
        %v2027 = vmax.f32 %v2025, %v2026
        %v2028 = vrot.slane %v2027, 4
        %v2029 = vmax.f32 %v2027, %v2028
        %v2030 = vrot.slane %v2029, 2
        %v2031 = vmax.f32 %v2029, %v2030
        %v2032 = vrot.slane %v2031, 1
        %v2033 = vmax.f32 %v2031, %v2032
        %v2034 = vmax.f32 %v1995, %v2033
        %v2035 = vsub.f32 %v1995, %v2034
        %v2036 = vmul.f32 %v2035, 1.442695
        %v2037 = vpow.pop %v2036
        %v2039 = vlaneseq
        %v2040 = vshrl.u32 %v2039, 7
        %v2041 = vsub.s32 0, %v2040
        %v2042 = vrot.slane %v2034, %v2041
        %v2044 = vsub.f32 %v1979, %v2042
        %v2045 = vsub.f32 %v1980, %v2042
        %v2046 = vsub.f32 %v1981, %v2042
        %v2047 = vsub.f32 %v1982, %v2042
        %v2048 = vsub.f32 %v1983, %v2042
        %v2049 = vsub.f32 %v1984, %v2042
        %v2050 = vsub.f32 %v1985, %v2042
        %v2051 = vsub.f32 %v1986, %v2042
        %v2052 = vsub.f32 %v1987, %v2042
        %v2053 = vsub.f32 %v1988, %v2042
        %v2054 = vsub.f32 %v1989, %v2042
        %v2055 = vsub.f32 %v1990, %v2042
        %v2056 = vsub.f32 %v1991, %v2042
        %v2057 = vsub.f32 %v1992, %v2042
        %v2058 = vsub.f32 %v1993, %v2042
        %v2059 = vsub.f32 %v1994, %v2042
        %v2060 = vmul.f32 %v2044, 1.442695
        %v2061 = vpow.pop %v2060
        %v2062 = vmul.f32 %v2045, 1.442695
        %v2063 = vpow.pop %v2062
        %v2064 = vmul.f32 %v2046, 1.442695
        %v2065 = vpow.pop %v2064
        %v2066 = vmul.f32 %v2047, 1.442695
        %v2067 = vpow.pop %v2066
        %v2068 = vmul.f32 %v2048, 1.442695
        %v2069 = vpow.pop %v2068
        %v2070 = vmul.f32 %v2049, 1.442695
        %v2071 = vpow.pop %v2070
        %v2072 = vmul.f32 %v2050, 1.442695
        %v2073 = vpow.pop %v2072
        %v2074 = vmul.f32 %v2051, 1.442695
        %v2075 = vpow.pop %v2074
        %v2076 = vmul.f32 %v2052, 1.442695
        %v2077 = vpow.pop %v2076
        %v2078 = vmul.f32 %v2053, 1.442695
        %v2079 = vpow.pop %v2078
        %v2080 = vmul.f32 %v2054, 1.442695
        %v2081 = vpow.pop %v2080
        %v2082 = vmul.f32 %v2055, 1.442695
        %v2083 = vpow.pop %v2082
        %v2084 = vmul.f32 %v2056, 1.442695
        %v2085 = vpow.pop %v2084
        %v2086 = vmul.f32 %v2057, 1.442695
        %v2087 = vpow.pop %v2086
        %v2088 = vmul.f32 %v2058, 1.442695
        %v2089 = vpow.pop %v2088
        %v2090 = vmul.f32 %v2059, 1.442695
        %v2091 = vpow.pop %v2090
        %v2092 = vld [vmem:[#allocation3] sm:$0xf]
        %2094 = vset.pattern.permute.xlu0 0
        %2095 = vperm.xlu0 %2094, %v2037
        %v2096 = vpop.permute.xlu0 %2095
        %v2098 = vlaneseq
        %v2099 = vshrl.u32 %v2098, 7
        %v2100 = vsub.s32 0, %v2099
        %v2101 = vrot.slane %v2096, %v2100
        %v2102 = vmul.f32 %v2101, %v2092
        %2104 = vset.pattern.permute.xlu0 0
        %2105 = vperm.xlu0 %2104, %v2061
        %v2106 = vpop.permute.xlu0 %2105
        %2109 = vset.pattern.permute.xlu0 0
        %2110 = vperm.xlu0 %2109, %v2063
        %v2111 = vpop.permute.xlu0 %2110
        %2114 = vset.pattern.permute.xlu0 0
        %2115 = vperm.xlu0 %2114, %v2065
        %v2116 = vpop.permute.xlu0 %2115
        %2119 = vset.pattern.permute.xlu0 0
        %2120 = vperm.xlu0 %2119, %v2067
        %v2121 = vpop.permute.xlu0 %2120
        %2124 = vset.pattern.permute.xlu0 0
        %2125 = vperm.xlu0 %2124, %v2069
        %v2126 = vpop.permute.xlu0 %2125
        %2129 = vset.pattern.permute.xlu0 0
        %2130 = vperm.xlu0 %2129, %v2071
        %v2131 = vpop.permute.xlu0 %2130
        %2134 = vset.pattern.permute.xlu0 0
        %2135 = vperm.xlu0 %2134, %v2073
        %v2136 = vpop.permute.xlu0 %2135
        %2139 = vset.pattern.permute.xlu0 0
        %2140 = vperm.xlu0 %2139, %v2075
        %v2141 = vpop.permute.xlu0 %2140
        %2144 = vset.pattern.permute.xlu0 0
        %2145 = vperm.xlu0 %2144, %v2077
        %v2146 = vpop.permute.xlu0 %2145
        %2149 = vset.pattern.permute.xlu0 0
        %2150 = vperm.xlu0 %2149, %v2079
        %v2151 = vpop.permute.xlu0 %2150
        %2154 = vset.pattern.permute.xlu0 0
        %2155 = vperm.xlu0 %2154, %v2081
        %v2156 = vpop.permute.xlu0 %2155
        %2159 = vset.pattern.permute.xlu0 0
        %2160 = vperm.xlu0 %2159, %v2083
        %v2161 = vpop.permute.xlu0 %2160
        %2164 = vset.pattern.permute.xlu0 0
        %2165 = vperm.xlu0 %2164, %v2085
        %v2166 = vpop.permute.xlu0 %2165
        %2169 = vset.pattern.permute.xlu0 0
        %2170 = vperm.xlu0 %2169, %v2087
        %v2171 = vpop.permute.xlu0 %2170
        %2174 = vset.pattern.permute.xlu0 0
        %2175 = vperm.xlu0 %2174, %v2089
        %v2176 = vpop.permute.xlu0 %2175
        %2179 = vset.pattern.permute.xlu0 0
        %2180 = vperm.xlu0 %2179, %v2091
        %v2181 = vpop.permute.xlu0 %2180
        %v2183 = vmul.f32 %v2106, %v1234
        %v2184 = vmul.f32 %v2106, %v1235
        %v2185 = vmul.f32 %v2106, %v1236
        %v2186 = vmul.f32 %v2106, %v1237
        %v2187 = vmul.f32 %v2111, %v1238
        %v2188 = vmul.f32 %v2111, %v1239
        %v2189 = vmul.f32 %v2111, %v1240
        %v2190 = vmul.f32 %v2111, %v1241
        %v2191 = vmul.f32 %v2116, %v1242
        %v2192 = vmul.f32 %v2116, %v1243
        %v2193 = vmul.f32 %v2116, %v1244
        %v2194 = vmul.f32 %v2116, %v1245
        %v2195 = vmul.f32 %v2121, %v1246
        %v2196 = vmul.f32 %v2121, %v1247
        %v2197 = vmul.f32 %v2121, %v1248
        %v2198 = vmul.f32 %v2121, %v1249
        %v2199 = vmul.f32 %v2126, %v1250
        %v2200 = vmul.f32 %v2126, %v1251
        %v2201 = vmul.f32 %v2126, %v1252
        %v2202 = vmul.f32 %v2126, %v1253
        %v2203 = vmul.f32 %v2131, %v1254
        %v2204 = vmul.f32 %v2131, %v1255
        %v2205 = vmul.f32 %v2131, %v1256
        %v2206 = vmul.f32 %v2131, %v1257
        %v2207 = vmul.f32 %v2136, %v1258
        %v2208 = vmul.f32 %v2136, %v1259
        %v2209 = vmul.f32 %v2136, %v1260
        %v2210 = vmul.f32 %v2136, %v1261
        %v2211 = vmul.f32 %v2141, %v1262
        %v2212 = vmul.f32 %v2141, %v1263
        %v2213 = vmul.f32 %v2141, %v1264
        %v2214 = vmul.f32 %v2141, %v1265
        %v2215 = vmul.f32 %v2146, %v1266
        %v2216 = vmul.f32 %v2146, %v1267
        %v2217 = vmul.f32 %v2146, %v1268
        %v2218 = vmul.f32 %v2146, %v1269
        %v2219 = vmul.f32 %v2151, %v1270
        %v2220 = vmul.f32 %v2151, %v1271
        %v2221 = vmul.f32 %v2151, %v1272
        %v2222 = vmul.f32 %v2151, %v1273
        %v2223 = vmul.f32 %v2156, %v1274
        %v2224 = vmul.f32 %v2156, %v1275
        %v2225 = vmul.f32 %v2156, %v1276
        %v2226 = vmul.f32 %v2156, %v1277
        %v2227 = vmul.f32 %v2161, %v1278
        %v2228 = vmul.f32 %v2161, %v1279
        %v2229 = vmul.f32 %v2161, %v1280
        %v2230 = vmul.f32 %v2161, %v1281
        %v2231 = vmul.f32 %v2166, %v1282
        %v2232 = vmul.f32 %v2166, %v1283
        %v2233 = vmul.f32 %v2166, %v1284
        %v2234 = vmul.f32 %v2166, %v1285
        %v2235 = vmul.f32 %v2171, %v1286
        %v2236 = vmul.f32 %v2171, %v1287
        %v2237 = vmul.f32 %v2171, %v1288
        %v2238 = vmul.f32 %v2171, %v1289
        %v2239 = vmul.f32 %v2176, %v1290
        %v2240 = vmul.f32 %v2176, %v1291
        %v2241 = vmul.f32 %v2176, %v1292
        %v2242 = vmul.f32 %v2176, %v1293
        %v2243 = vmul.f32 %v2181, %v1294
        %v2244 = vmul.f32 %v2181, %v1295
        %v2245 = vmul.f32 %v2181, %v1296
        %v2246 = vmul.f32 %v2181, %v1297
        %v2247 = vadd.f32 %v2183, %v2187
        %v2248 = vadd.f32 %v2247, %v2191
        %v2249 = vadd.f32 %v2248, %v2195
        %v2250 = vadd.f32 %v2249, %v2199
        %v2251 = vadd.f32 %v2250, %v2203
        %v2252 = vadd.f32 %v2251, %v2207
        %v2253 = vadd.f32 %v2252, %v2211
        %v2254 = vadd.f32 %v2253, %v2215
        %v2255 = vadd.f32 %v2254, %v2219
        %v2256 = vadd.f32 %v2255, %v2223
        %v2257 = vadd.f32 %v2256, %v2227
        %v2258 = vadd.f32 %v2257, %v2231
        %v2259 = vadd.f32 %v2258, %v2235
        %v2260 = vadd.f32 %v2259, %v2239
        %v2261 = vadd.f32 %v2260, %v2243
        %v2262 = vrot.slane %v2261, 4
        %v2263 = vadd.f32 %v2261, %v2262
        %v2264 = vrot.slane %v2263, 2
        %v2265 = vadd.f32 %v2263, %v2264
        %v2266 = vrot.slane %v2265, 1
        %v2267 = vadd.f32 %v2265, %v2266
        %v2268 = vadd.f32 %v2184, %v2188
        %v2269 = vadd.f32 %v2268, %v2192
        %v2270 = vadd.f32 %v2269, %v2196
        %v2271 = vadd.f32 %v2270, %v2200
        %v2272 = vadd.f32 %v2271, %v2204
        %v2273 = vadd.f32 %v2272, %v2208
        %v2274 = vadd.f32 %v2273, %v2212
        %v2275 = vadd.f32 %v2274, %v2216
        %v2276 = vadd.f32 %v2275, %v2220
        %v2277 = vadd.f32 %v2276, %v2224
        %v2278 = vadd.f32 %v2277, %v2228
        %v2279 = vadd.f32 %v2278, %v2232
        %v2280 = vadd.f32 %v2279, %v2236
        %v2281 = vadd.f32 %v2280, %v2240
        %v2282 = vadd.f32 %v2281, %v2244
        %v2283 = vrot.slane %v2282, 4
        %v2284 = vadd.f32 %v2282, %v2283
        %v2285 = vrot.slane %v2284, 2
        %v2286 = vadd.f32 %v2284, %v2285
        %v2287 = vrot.slane %v2286, 1
        %v2288 = vadd.f32 %v2286, %v2287
        %v2289 = vadd.f32 %v2185, %v2189
        %v2290 = vadd.f32 %v2289, %v2193
        %v2291 = vadd.f32 %v2290, %v2197
        %v2292 = vadd.f32 %v2291, %v2201
        %v2293 = vadd.f32 %v2292, %v2205
        %v2294 = vadd.f32 %v2293, %v2209
        %v2295 = vadd.f32 %v2294, %v2213
        %v2296 = vadd.f32 %v2295, %v2217
        %v2297 = vadd.f32 %v2296, %v2221
        %v2298 = vadd.f32 %v2297, %v2225
        %v2299 = vadd.f32 %v2298, %v2229
        %v2300 = vadd.f32 %v2299, %v2233
        %v2301 = vadd.f32 %v2300, %v2237
        %v2302 = vadd.f32 %v2301, %v2241
        %v2303 = vadd.f32 %v2302, %v2245
        %v2304 = vrot.slane %v2303, 4
        %v2305 = vadd.f32 %v2303, %v2304
        %v2306 = vrot.slane %v2305, 2
        %v2307 = vadd.f32 %v2305, %v2306
        %v2308 = vrot.slane %v2307, 1
        %v2309 = vadd.f32 %v2307, %v2308
        %v2310 = vadd.f32 %v2186, %v2190
        %v2311 = vadd.f32 %v2310, %v2194
        %v2312 = vadd.f32 %v2311, %v2198
        %v2313 = vadd.f32 %v2312, %v2202
        %v2314 = vadd.f32 %v2313, %v2206
        %v2315 = vadd.f32 %v2314, %v2210
        %v2316 = vadd.f32 %v2315, %v2214
        %v2317 = vadd.f32 %v2316, %v2218
        %v2318 = vadd.f32 %v2317, %v2222
        %v2319 = vadd.f32 %v2318, %v2226
        %v2320 = vadd.f32 %v2319, %v2230
        %v2321 = vadd.f32 %v2320, %v2234
        %v2322 = vadd.f32 %v2321, %v2238
        %v2323 = vadd.f32 %v2322, %v2242
        %v2324 = vadd.f32 %v2323, %v2246
        %v2325 = vrot.slane %v2324, 4
        %v2326 = vadd.f32 %v2324, %v2325
        %v2327 = vrot.slane %v2326, 2
        %v2328 = vadd.f32 %v2326, %v2327
        %v2329 = vrot.slane %v2328, 1
        %v2330 = vadd.f32 %v2328, %v2329
        %v2335 = vcombine.low %v2267, %v2288
        %v2336 = vcombine.low %v2309, %v2330
        %v2338 = vunpack.c.l.s4 1966171168
        %v2339 = vunpack.c.0.s8 %v2338
        %v2340 = vlaneseq
        %v2341 = vshrl.u32 %v2340, 7
        %v2342 = vsub.s32 %v2339, %v2341
        %v2343 = vrot.slane %v2335, %v2342
        %v2345 = vunpack.c.l.s4 1966171168
        %v2346 = vunpack.c.0.s8 %v2345
        %v2347 = vlaneseq
        %v2348 = vshrl.u32 %v2347, 7
        %v2349 = vsub.s32 %v2346, %v2348
        %v2350 = vrot.slane %v2336, %v2349
        %v2351 = vcombine.low %v2343, %v2350
        %v2353 = vunpack.c.l.s4 1966171168
        %v2354 = vunpack.c.0.s8 %v2353
        %v2355 = vlaneseq
        %v2356 = vshrl.u32 %v2355, 7
        %v2357 = vsub.s32 %v2354, %v2356
        %v2358 = vrot.slane %v2351, %v2357
        %v2360 = vadd.f32 %v2102, %v2358
        %v2361 = vlaneseq
        %vm2362 = vcmp.ge.s32.totalorder %v2361, 0
        %vm2363 = vcmp.lt.s32.totalorder %v2361, 512
        %vm2364 = vmand %vm2362, %vm2363
        %2365 = vst.msk [vmem:[#allocation3] sm:$0xf] %vm2364, %v2360
        %vm2366 = vcmask 0
        %2367 = vst.msk [vmem:[#allocation2] sm:$0x1] %vm2366, %v2034
        // Predicated region
        $region65: #{tpu_custom_call.1} parent=47 // pred_check
          %p2368 = pneg %p395
        $region66: #{tpu_custom_call.1} parent=47 // pred_check_branch
          %2370 = sbr.rel (%p2368) target = $region68
        $region67: #{tpu_custom_call.1} parent=47 // pred_region
          %v2371 = vld [vmem:[#allocation3] sm:$0xf]
          %2372 = vst.msk [vmem:[%s378] sm:$0xf] %vm2364, %v2371
          %v2373 = vld [vmem:[#allocation2] sm:$0x1]
          %2374 = vst.msk [vmem:[%s393] sm:$0x1] %vm2366, %v2373
        $region68: #{tpu_custom_call.1} parent=47 // pred_fallthru
          _
        %s2375 = sand.u32 %s203, 1
        %s2376 = scalar_lea.sflag [#allocation7], %s2375
        %s2377 = sand.u32 %s203, 1
        %s2378 = smul.addr %s2377, 4
        %s2379 = scalar_lea.vmem [#allocation11], %s2378
        %p2380 = scmp.lt.s32.totalorder %s33, 1
        %s2381 = scalar_select %p2380, %s33, 1
        %s2382 = scalar_lea.vmem %s8, %s2381
        // Predicated region
        $region69: #{tpu_custom_call.1} parent=47 // pred_check
          %p2383 = pneg %p213
        $region70: #{tpu_custom_call.1} parent=47 // pred_check_branch
          %2385 = sbr.rel (%p2383) target = $region72
        $region71: #{tpu_custom_call.1} parent=47 // pred_region
          %s2387 = ssub.s32 64, 64
          %2388 = vsyncadd %s2376, %s2387
          %s2389 = smul.addr %s33, 4
          %s2390 = smul.addr %s2389, 16
          %s2391 = scalar_lea.hbm %s7, %s2390
          %s2393 = sshll.u32 %s2379, 4
          %s2394 = int_to_ptr.vmem [resolvable:$true] %s2393
          %2396 = dma.vmem_to_hbm [thread:$0]  %s2394, 64, %s2391, %s2376
        $region72: #{tpu_custom_call.1} parent=47 // pred_fallthru
          _
        // Predicated region
        $region73: #{tpu_custom_call.1} parent=47 // pred_check
          %p2397 = pneg %p239
        $region74: #{tpu_custom_call.1} parent=47 // pred_check_branch
          %2399 = sbr.rel (%p2397) target = $region76
        $region75: #{tpu_custom_call.1} parent=47 // pred_region
          _
        $region76: #{tpu_custom_call.1} parent=47 // pred_fallthru
          _
      $region48: #{tpu_custom_call.1} parent=5 // pred_fallthru
        _
      %p2400 = scmp.le.s32.totalorder 2, %s24
      // Predicated region
      $region77: #{tpu_custom_call.1} parent=5 // pred_check
        %p2401 = pneg %p2400
      $region78: #{tpu_custom_call.1} parent=5 // pred_check_branch
        %2403 = sbr.rel (%p2401) target = $region80
      $region79: #{tpu_custom_call.1} parent=5 // pred_region
        %s2404 = ssub.s32 %s24, 2
        // Predicated region
        $region81: #{tpu_custom_call.1} parent=79 // pred_check
          %p2405 = pneg %p219
        $region82: #{tpu_custom_call.1} parent=79 // pred_check_branch
          %2407 = sbr.rel (%p2405) target = $region84
        $region83: #{tpu_custom_call.1} parent=79 // pred_region
          %s2408 = sand.u32 %s204, 1
          %s2409 = scalar_lea.sflag [#allocation7], %s2408
          %s2410 = sand.u32 %s204, 1
          %s2411 = smul.addr %s2410, 4
          %s2412 = scalar_lea.vmem [#allocation11], %s2411
          %2413 = dma.done %s2409, 64
        $region84: #{tpu_custom_call.1} parent=79 // pred_fallthru
          _
        // Predicated region
        $region85: #{tpu_custom_call.1} parent=79 // pred_check
          %p2414 = pneg %p245
        $region86: #{tpu_custom_call.1} parent=79 // pred_check_branch
          %2416 = sbr.rel (%p2414) target = $region88
        $region87: #{tpu_custom_call.1} parent=79 // pred_region
          %p2417 = scmp.lt.s32.totalorder %s35, 1
          %s2418 = scalar_select %p2417, %s35, 1
          %s2419 = scalar_lea.vmem %s8, %s2418
        $region88: #{tpu_custom_call.1} parent=79 // pred_fallthru
          _
      $region80: #{tpu_custom_call.1} parent=5 // pred_fallthru
        _
    $region6: #{tpu_custom_call.1} parent=1 // loop_footer
      %s28 = sadd.s32 1, %s24
    $region7: #{tpu_custom_call.1} parent=1 // loop_footer_branch
      %23 = sbr.rel target = $region3
    $region8: #{tpu_custom_call.1} parent=1 // loop_exit
      _
    %2420 = vsyncpa [#allocation6], 1
    %s2421 = scalar_lea.sflag [#allocation6], 1
    %2422 = vsyncpa %s2421, 1
    %2423 = vsyncpa [#allocation9], 1
    %2424 = vsyncpa [#allocation7], 1
    %s2425 = scalar_lea.sflag [#allocation7], 1
    %2426 = vsyncpa %s2425, 1

</llo_original>
